<compile_context>
chip_gen: v7x
topology: tpu7x:2x2x1
jax: 0.10.0
libtpu: 0.0.40
codegen_flags: <defaults>
</compile_context>

<pallas_src>
import functools

import jax
import jax.numpy as jnp
import numpy as np
from jax.experimental import pallas as pl
from jax.experimental.pallas import tpu as pltpu


def _round8(v):
    return ((v + 7) // 8) * 8


# ----------------------------------------------------------------------------
# Fused forward kernel (grid over batch; one sample per grid step)
# ----------------------------------------------------------------------------
def _model3_fused_kernel(x_ref, conv_ref, sel_ref, fc_ref, out_ref, xcat_ref, *, g):
    f32 = jnp.float32
    nb, hf, F = g["nb"], g["hf"], g["F"]

    def selector(off, rows, cols):
        return sel_ref[off:off + rows, 0:cols]

    def conv_relu_pool(xh, lay):
        # xh: (nblk * nrowx, K) activation rows.  One fused banded-matmul conv
        # (the 3 dy taps + the previous pool's column subsample / halo are
        # already folded into `cb`), then ReLU and a stride-1 2x2 max (the
        # stride-2 subsample is folded into the next selector / banded const).
        nrowx, nrows, K, nblk, kcb, N, co, cb_off, bias_row = lay
        for blk in range(nblk):
            base = blk * nrowx
            for dy in range(3):
                j = (blk * 3 + dy) * K
                xcat_ref[0:nrows, j:j + K] = xh[base + dy:base + dy + nrows, :]
        cb = conv_ref[cb_off:cb_off + kcb, 0:N]
        bias = conv_ref[bias_row:bias_row + 1, 0:N]
        y = jnp.dot(xcat_ref[0:nrows, 0:kcb], cb, preferred_element_type=f32)
        y = jnp.maximum(y + bias, 0.0)
        mh = jnp.maximum(y[:, :N - co], y[:, co:])          # horizontal pair max
        return jnp.maximum(mh[:-1, :], mh[1:, :])           # vertical pair max

    # ---- layer 1: zero-pad / halo placement via constant row-scatter matmul ---
    xh = jnp.dot(selector(*g["rall"]), x_ref[0], preferred_element_type=f32)
    m = conv_relu_pool(xh, g["lay1"])

    # ---- layers 2 and 3: row selection (pool subsample + halo rows), conv -----
    for sel_key, lay_key in (("sr1", "lay2"), ("sr2", "lay3")):
        xh = jnp.dot(selector(*g[sel_key]), m, preferred_element_type=f32)
        m = conv_relu_pool(xh, g[lay_key])

    # ---- fc1: final pool column subsample + NCHW flatten + weight permutation
    # folded into Wcat; row selection folded into SRcat; hf diagonal-block sum.
    wcat = fc_ref[0:g["KW"], 0:hf * F]
    p = jnp.dot(m, wcat, preferred_element_type=f32)                   # (rows_m3, hf*F)
    q = jnp.dot(selector(*g["srcat"]), p, preferred_element_type=f32)  # (hf*nb, hf*F)
    acc = q[0:nb, 0:F]
    for t in range(1, hf):
        acc = acc + q[t * nb:(t + 1) * nb, t * F:(t + 1) * F]
    fc1_b = fc_ref[g["fc1b_row"]:g["fc1b_row"] + 1, 0:F]
    hidden = jnp.maximum(acc + fc1_b, 0.0)                             # (nb, F)

    # ---- fc2 + numerically-safe sigmoid (clip keeps |err| < 3e-7, out in (0,1))
    fc2_w = fc_ref[g["fc2w_row"]:g["fc2w_row"] + F, 0:1]               # (F, 1)
    fc2_b = fc_ref[g["fc2b_row"]:g["fc2b_row"] + 1, 0:1]
    logit = jnp.dot(hidden, fc2_w, preferred_element_type=f32) + fc2_b
    logit = jnp.clip(logit, -15.0, 15.0)
    out_ref[0] = 1.0 / (1.0 + jnp.exp(-logit))


# ----------------------------------------------------------------------------
# One-time (init) folding of the PyTorch-layout params into 3 packed constants
# ----------------------------------------------------------------------------
def _build_kernel_constants(params, *, input_dim, in_channels, out_channels, nb):
    c0 = in_channels
    c1, c2, c3 = out_channels, out_channels * 2, out_channels * 4
    h1, h2, h3, hf = input_dim, input_dim // 2, input_dim // 4, input_dim // 8

    def banded(w_oihw, w_sp, ci, co):
        # B_dy[(wp+dx)*ci + i, wp*co + o] = W[o, i, dy, dx]
        w_np = np.asarray(w_oihw, np.float32)
        mats = []
        for dy in range(3):
            mat = np.zeros(((w_sp + 4) * ci, (w_sp + 2) * co), np.float32)
            for dx in range(3):
                tap = w_np[:, :, dy, dx].T                    # (ci, co)
                for wp in range(w_sp + 2):
                    r0 = (wp + dx) * ci
                    mat[r0:r0 + ci, wp * co:(wp + 1) * co] = tap
            mats.append(mat)
        return mats

    def col_select(w_in, w_out, co):
        # stride-2 column subsample of the stride-1 pair max + zero halo blocks
        s = np.zeros(((w_in + 1) * co, (w_out + 4) * co), np.float32)
        for wo in range(w_out):
            for c in range(co):
                s[(2 * wo + 1) * co + c, (wo + 2) * co + c] = 1.0
        return s

    def row_select(h_in, h_out):
        # stride-2 row subsample + placement at the next layer's padded rows
        s = np.zeros((nb * (h_out + 2) + 2, nb * (h_in + 2) - 1), np.float32)
        for b in range(nb):
            for ho in range(h_out):
                s[2 + b * (h_out + 2) + ho, b * (h_in + 2) + 2 * ho + 1] = 1.0
        return s

    def bias_row(b, w_sp):
        return np.tile(np.asarray(b, np.float32), w_sp + 2)

    # conv1: fold the per-input-channel lane scatter into the banded taps
    b1 = banded(params["conv1_w"], h1, c0, c1)
    cb1_blocks = []
    for c in range(c0):
        cc = np.zeros((h1, (h1 + 4) * c0), np.float32)
        for xw in range(h1):
            cc[xw, (xw + 2) * c0 + c] = 1.0
        cb1_blocks += [cc @ b1[dy] for dy in range(3)]
    cb1 = np.concatenate(cb1_blocks, axis=0)                  # (3*c0*h1, (h1+2)*c1)

    # conv2 / conv3: fold the previous pool's column selector into the taps
    b2 = banded(params["conv2_w"], h2, c1, c2)
    sc1 = col_select(h1, h2, c1)
    cb2 = np.concatenate([sc1 @ b2[dy] for dy in range(3)], axis=0)
    b3 = banded(params["conv3_w"], h3, c2, c3)
    sc2 = col_select(h2, h3, c2)
    cb3 = np.concatenate([sc2 @ b3[dy] for dy in range(3)], axis=0)

    # row selectors (batch block = nb samples; nb=1 at call site)
    nrowx1 = nb * (h1 + 2) + 2
    rall = np.zeros((c0 * nrowx1, nb * c0 * h1), np.float32)
    for c in range(c0):
        for b in range(nb):
            for y in range(h1):
                rall[c * nrowx1 + 2 + b * (h1 + 2) + y, (b * c0 + c) * h1 + y] = 1.0
    sr1 = row_select(h1, h2)
    sr2 = row_select(h2, h3)
    srcat = np.zeros((hf * nb, nb * (h3 + 2) - 1), np.float32)
    for t in range(hf):
        for b in range(nb):
            srcat[t * nb + b, b * (h3 + 2) + 2 * t + 1] = 1.0

    # fc1: final pool column subsample + NCHW flatten + weight permutation
    w1 = np.asarray(params["fc1_w"], np.float32)              # (F, hf*hf*c3)
    F = w1.shape[0]
    KW = (h3 + 1) * c3
    wcat = np.zeros((KW, hf * F), np.float32)
    for t in range(hf):                                       # t = output row (ho)
        for wo in range(hf):
            for c in range(c3):
                wcat[(2 * wo + 1) * c3 + c, t * F:(t + 1) * F] = \
                    w1[:, c * (hf * hf) + t * hf + wo]

    # -------------------- pack into 3 lane-dense VMEM slabs --------------------
    n1, n2, n3 = cb1.shape[1], cb2.shape[1], cb3.shape[1]
    k1, k2, k3 = cb1.shape[0], cb2.shape[0], cb3.shape[0]
    off2 = _round8(k1)
    off3 = off2 + _round8(k2)
    offb = off3 + _round8(k3)
    pack_conv = np.zeros((offb + 8, max(n1, n2, n3)), np.float32)
    pack_conv[0:k1, :n1] = cb1
    pack_conv[off2:off2 + k2, :n2] = cb2
    pack_conv[off3:off3 + k3, :n3] = cb3
    pack_conv[offb + 0, :n1] = bias_row(params["conv1_b"], h1)
    pack_conv[offb + 1, :n2] = bias_row(params["conv2_b"], h2)
    pack_conv[offb + 2, :n3] = bias_row(params["conv3_b"], h3)

    sels = (rall, sr1, sr2, srcat)
    sel_offs, r = [], 0
    for s in sels:
        sel_offs.append(r)
        r += _round8(s.shape[0])
    pack_sel = np.zeros((r, max(s.shape[1] for s in sels)), np.float32)
    for s, o in zip(sels, sel_offs):
        pack_sel[o:o + s.shape[0], :s.shape[1]] = s

    fc1b_row = _round8(KW)
    fc2b_row = fc1b_row + 1
    fc2w_row = fc1b_row + 8
    pack_fc = np.zeros((fc2w_row + _round8(F), max(hf * F, F)), np.float32)
    pack_fc[0:KW, :hf * F] = wcat
    pack_fc[fc1b_row, :F] = np.asarray(params["fc1_b"], np.float32)
    pack_fc[fc2b_row, 0] = float(np.asarray(params["fc2_b"], np.float32).reshape(-1)[0])
    pack_fc[fc2w_row:fc2w_row + F, 0] = np.asarray(params["fc2_w"], np.float32).reshape(-1)

    # -------------------------- static kernel geometry -------------------------
    nrows1 = nb * (h1 + 2)
    nrowx2, nrows2 = nb * (h2 + 2) + 2, nb * (h2 + 2)
    nrowx3, nrows3 = nb * (h3 + 2) + 2, nb * (h3 + 2)
    g = dict(
        nb=nb, hf=hf, F=F, KW=KW,
        lay1=(nrowx1, nrows1, h1, c0, k1, n1, c1, 0, offb + 0),
        lay2=(nrowx2, nrows2, (h1 + 1) * c1, 1, k2, n2, c2, off2, offb + 1),
        lay3=(nrowx3, nrows3, (h2 + 1) * c2, 1, k3, n3, c3, off3, offb + 2),
        rall=(sel_offs[0],) + rall.shape,
        sr1=(sel_offs[1],) + sr1.shape,
        sr2=(sel_offs[2],) + sr2.shape,
        srcat=(sel_offs[3],) + srcat.shape,
        fc1b_row=fc1b_row, fc2b_row=fc2b_row, fc2w_row=fc2w_row,
        xcat_rows=_round8(max(nrows1, nrows2, nrows3)),
        xcat_lanes=max(k1, k2, k3),
    )
    dot_mkn = (
        (rall.shape[0], rall.shape[1], h1),
        (nrows1, k1, n1),
        (sr1.shape[0], sr1.shape[1], (h1 + 1) * c1),
        (nrows2, k2, n2),
        (sr2.shape[0], sr2.shape[1], (h2 + 1) * c2),
        (nrows3, k3, n3),
        (nrows3 - 1, KW, hf * F),
        (srcat.shape[0], srcat.shape[1], hf * F),
        (nb, F, 1),
    )
    g["flops_per_block"] = int(sum(2 * m * k * n for m, k, n in dot_mkn))
    consts = tuple(jnp.asarray(a) for a in (pack_conv, pack_sel, pack_fc))
    return consts, g


def make_model3_forward(params, *, input_dim, in_channels, out_channels, batch):
    # nb=1: one sample per grid step (batch / input_dim are baked into the
    # selector constants; call forward with the same batch it was built for).
    consts, g = _build_kernel_constants(params, input_dim=input_dim,
                                        in_channels=in_channels,
                                        out_channels=out_channels, nb=1)
    pack_conv, pack_sel, pack_fc = consts
    kernel = functools.partial(_model3_fused_kernel, g=g)
    c0, h1 = in_channels, input_dim

    const_bytes = sum(int(np.prod(c.shape)) * 4 for c in consts)
    cost = pl.CostEstimate(
        flops=g["flops_per_block"] * batch,
        transcendentals=batch,
        bytes_accessed=const_bytes + batch * (c0 * h1 * h1 + 1) * 4)

    grid_spec = pltpu.PrefetchScalarGridSpec(
        num_scalar_prefetch=0,
        grid=(batch,),
        in_specs=[
            pl.BlockSpec((1, c0 * h1, h1), lambda b: (b, 0, 0)),
            pl.BlockSpec(pack_conv.shape, lambda b: (0, 0)),
            pl.BlockSpec(pack_sel.shape, lambda b: (0, 0)),
            pl.BlockSpec(pack_fc.shape, lambda b: (0, 0)),
        ],
        out_specs=pl.BlockSpec((1, 1, 1), lambda b: (b, 0, 0)),
        scratch_shapes=[pltpu.VMEM((g["xcat_rows"], g["xcat_lanes"]), jnp.float32)],
    )
    call = pl.pallas_call(
        kernel,
        out_shape=jax.ShapeDtypeStruct((batch, 1, 1), jnp.float32),
        grid_spec=grid_spec,
        compiler_params=pltpu.CompilerParams(
            dimension_semantics=("parallel",),          # uses both TCs on v7x
            vmem_limit_bytes=max(8 * 1024 * 1024, 4 * const_bytes)),
        cost_estimate=cost,
    )

    @jax.jit
    def forward(x_nchw):
        n, ci, h, w = x_nchw.shape
        # metadata-only reshape (contiguous NCHW -> (N, Ci*H, W)); all padding /
        # halo placement happens inside the kernel via a constant scatter matmul.
        x3d = x_nchw.astype(jnp.float32).reshape(n, ci * h, w)
        out = call(x3d, pack_conv, pack_sel, pack_fc)
        return out.reshape(n, 1)

    return forward


# ----------------------------------------------------------------------------
# Deterministic parameter init (PyTorch layouts) and pure-JAX reference
# ----------------------------------------------------------------------------
def init_params(key, input_dim=16, in_channels=1, out_channels=8):
    ks = jax.random.split(key, 8)

    def w(k, shape, fan_in):
        return (jax.random.normal(k, shape, jnp.float32)
                / jnp.sqrt(jnp.float32(fan_in)))

    c1, c2, c3 = out_channels, out_channels * 2, out_channels * 4
    flatten_dim = (input_dim // 8) ** 2 * c3
    params = {
        "conv1_w": w(ks[0], (c1, in_channels, 3, 3), in_channels * 9),
        "conv1_b": 0.01 * jnp.arange(c1, dtype=jnp.float32),
        "conv2_w": w(ks[1], (c2, c1, 3, 3), c1 * 9),
        "conv2_b": 0.01 * jnp.arange(c2, dtype=jnp.float32),
        "conv3_w": w(ks[2], (c3, c2, 3, 3), c2 * 9),
        "conv3_b": 0.01 * jnp.arange(c3, dtype=jnp.float32),
        # PyTorch Linear stores (out_features, in_features)
        "fc1_w": w(ks[3], (flatten_dim // 2, flatten_dim), flatten_dim),
        "fc1_b": 0.01 * jnp.arange(flatten_dim // 2, dtype=jnp.float32),
        "fc2_w": w(ks[4], (1, flatten_dim // 2), flatten_dim // 2),
        "fc2_b": jnp.full((1,), 0.05, jnp.float32),
    }
    return params, flatten_dim


def model3_reference(x_nchw, params):
    """Plain-JAX reference with the exact PyTorch forward semantics."""
    def conv(x, w, b):
        y = jax.lax.conv_general_dilated(
            x, w, window_strides=(1, 1), padding="SAME",
            dimension_numbers=("NCHW", "OIHW", "NCHW"))
        return y + b[None, :, None, None]

    def pool(x):
        return jax.lax.reduce_window(x, -jnp.inf, jax.lax.max,
                                     (1, 1, 2, 2), (1, 1, 2, 2), "VALID")

    x = x_nchw.astype(jnp.float32)
    x = pool(jnp.maximum(conv(x, params["conv1_w"], params["conv1_b"]), 0.0))
    x = pool(jnp.maximum(conv(x, params["conv2_w"], params["conv2_b"]), 0.0))
    x = pool(jnp.maximum(conv(x, params["conv3_w"], params["conv3_b"]), 0.0))
    flat = x.reshape(x.shape[0], -1)                   # NCHW flatten (= torch .view)
    h = jnp.maximum(flat @ params["fc1_w"].T + params["fc1_b"], 0.0)
    logit = h @ params["fc2_w"].T + params["fc2_b"]
    return jax.nn.sigmoid(logit)


if __name__ == "__main__":
    INPUT_DIM = 16        # small demo size consistent with the module (input_dim//8 >= 1)
    IN_CHANNELS = 1
    OUT_CHANNELS = 8
    BATCH = 2

    key = jax.random.PRNGKey(0)
    k_params, k_x = jax.random.split(key)
    params, flatten_dim = init_params(k_params, input_dim=INPUT_DIM,
                                      in_channels=IN_CHANNELS,
                                      out_channels=OUT_CHANNELS)
    x = jax.random.normal(k_x, (BATCH, IN_CHANNELS, INPUT_DIM, INPUT_DIM),
                          dtype=jnp.float32)

    forward = make_model3_forward(params, input_dim=INPUT_DIM,
                                  in_channels=IN_CHANNELS,
                                  out_channels=OUT_CHANNELS, batch=BATCH)
    out = jax.block_until_ready(forward(x))
    ref = jax.block_until_ready(model3_reference(x, params))

    assert out.shape == (BATCH, 1)
    assert bool(jnp.all(jnp.isfinite(out)))
    assert bool(jnp.all((out > 0.0) & (out < 1.0)))
    max_err = float(jnp.max(jnp.abs(out - ref)))
    assert max_err < 1e-4, f"kernel/reference mismatch: {max_err}"
    print("KERNEL_OK")
</pallas_src>

<mosaic_0001>
module attributes {stable_mosaic.version = 11 : i64} {
  func.func @_model3_fused_kernel(%arg0: i32, %arg1: memref<1x16x16xf32, #tpu.memory_space<vmem>>, %arg2: memref<896x192xf32, #tpu.memory_space<vmem>>, %arg3: memref<56x17xf32, #tpu.memory_space<vmem>>, %arg4: memref<232x128xf32, #tpu.memory_space<vmem>>, %arg5: memref<1x1x1xf32, #tpu.memory_space<vmem>>, %arg6: memref<24x432xf32, #tpu.memory_space<vmem>>) attributes {dimension_semantics = [#tpu.dimension_semantics<parallel>], iteration_bounds = array<i64: 2>, scalar_prefetch = 0 : i64, scratch_operands = 1 : i64, tpu.core_type = #tpu.core_type<tc>, window_params = [{transform_indices = @transform_0, window_bounds = array<i64: 1, 16, 16>}, {pipeline_mode = #tpu.pipeline_mode<synchronous>, transform_indices = @transform_1, window_bounds = array<i64: 896, 192>}, {pipeline_mode = #tpu.pipeline_mode<synchronous>, transform_indices = @transform_2, window_bounds = array<i64: 56, 17>}, {pipeline_mode = #tpu.pipeline_mode<synchronous>, transform_indices = @transform_3, window_bounds = array<i64: 232, 128>}, {transform_indices = @transform_4, window_bounds = array<i64: 1, 1, 1>}]} {
    %c0 = arith.constant 0 : index
    %c0_0 = arith.constant 0 : index
    %0 = vector.load %arg3[%c0, %c0_0] : memref<56x17xf32, #tpu.memory_space<vmem>>, vector<20x16xf32>
    %c0_1 = arith.constant 0 : index
    %c0_2 = arith.constant 0 : index
    %c0_3 = arith.constant 0 : index
    %1 = vector.load %arg1[%c0_1, %c0_2, %c0_3] : memref<1x16x16xf32, #tpu.memory_space<vmem>>, vector<1x16x16xf32>
    %2 = vector.shape_cast %1 : vector<1x16x16xf32> to vector<16x16xf32>
    %cst = arith.constant dense<0.000000e+00> : vector<20x16xf32>
    %3 = tpu.matmul %0, %2, %cst {dimension_numbers = #tpu.dot_dimension_numbers<[1], [0], [0], [1], [0, 0, 1, 1], [], []>} : vector<20x16xf32>, vector<16x16xf32>, vector<20x16xf32> -> vector<20x16xf32>
    %4 = vector.extract_strided_slice %3 {offsets = [0, 0], sizes = [18, 16], strides = [1, 1]} : vector<20x16xf32> to vector<18x16xf32>
    %c0_4 = arith.constant 0 : index
    %c0_5 = arith.constant 0 : index
    %5 = vector.load %arg6[%c0_4, %c0_5] : memref<24x432xf32, #tpu.memory_space<vmem>>, vector<18x16xf32>
    tpu.vector_store %arg6[%c0_4, %c0_5], %4 {strides = array<i32>} : memref<24x432xf32, #tpu.memory_space<vmem>>, vector<18x16xf32>,
    %6 = vector.extract_strided_slice %3 {offsets = [1, 0], sizes = [18, 16], strides = [1, 1]} : vector<20x16xf32> to vector<18x16xf32>
    %c0_6 = arith.constant 0 : index
    %c16 = arith.constant 16 : index
    %7 = vector.load %arg6[%c0_6, %c16] : memref<24x432xf32, #tpu.memory_space<vmem>>, vector<18x16xf32>
    tpu.vector_store %arg6[%c0_6, %c16], %6 {strides = array<i32>} : memref<24x432xf32, #tpu.memory_space<vmem>>, vector<18x16xf32>,
    %8 = vector.extract_strided_slice %3 {offsets = [2, 0], sizes = [18, 16], strides = [1, 1]} : vector<20x16xf32> to vector<18x16xf32>
    %c0_7 = arith.constant 0 : index
    %c32 = arith.constant 32 : index
    %9 = vector.load %arg6[%c0_7, %c32] : memref<24x432xf32, #tpu.memory_space<vmem>>, vector<18x16xf32>
    tpu.vector_store %arg6[%c0_7, %c32], %8 {strides = array<i32>} : memref<24x432xf32, #tpu.memory_space<vmem>>, vector<18x16xf32>,
    %c0_8 = arith.constant 0 : index
    %c0_9 = arith.constant 0 : index
    %10 = vector.load %arg2[%c0_8, %c0_9] : memref<896x192xf32, #tpu.memory_space<vmem>>, vector<48x144xf32>
    %c888 = arith.constant 888 : index
    %c0_10 = arith.constant 0 : index
    %11 = vector.load %arg2[%c888, %c0_10] : memref<896x192xf32, #tpu.memory_space<vmem>>, vector<1x144xf32>
    %c0_11 = arith.constant 0 : index
    %c0_12 = arith.constant 0 : index
    %12 = vector.load %arg6[%c0_11, %c0_12] : memref<24x432xf32, #tpu.memory_space<vmem>>, vector<18x48xf32>
    %cst_13 = arith.constant dense<0.000000e+00> : vector<18x144xf32>
    %13 = tpu.matmul %12, %10, %cst_13 {dimension_numbers = #tpu.dot_dimension_numbers<[1], [0], [0], [1], [0, 0, 1, 1], [], []>} : vector<18x48xf32>, vector<48x144xf32>, vector<18x144xf32> -> vector<18x144xf32>
    %14 = vector.broadcast %11 : vector<1x144xf32> to vector<18x144xf32>
    %15 = arith.addf %13, %14 : vector<18x144xf32>
    %cst_14 = arith.constant 0.000000e+00 : f32
    %16 = vector.broadcast %cst_14 : f32 to vector<18x144xf32>
    %17 = arith.maximumf %15, %16 : vector<18x144xf32>
    %18 = vector.extract_strided_slice %17 {offsets = [0, 0], sizes = [18, 136], strides = [1, 1]} : vector<18x144xf32> to vector<18x136xf32>
    %19 = vector.extract_strided_slice %17 {offsets = [0, 8], sizes = [18, 136], strides = [1, 1]} : vector<18x144xf32> to vector<18x136xf32>
    %20 = arith.maximumf %18, %19 : vector<18x136xf32>
    %21 = vector.extract_strided_slice %20 {offsets = [0, 0], sizes = [17, 136], strides = [1, 1]} : vector<18x136xf32> to vector<17x136xf32>
    %22 = vector.extract_strided_slice %20 {offsets = [1, 0], sizes = [17, 136], strides = [1, 1]} : vector<18x136xf32> to vector<17x136xf32>
    %23 = arith.maximumf %21, %22 : vector<17x136xf32>
    %c24 = arith.constant 24 : index
    %c0_15 = arith.constant 0 : index
    %24 = vector.load %arg3[%c24, %c0_15] : memref<56x17xf32, #tpu.memory_space<vmem>>, vector<12x17xf32>
    %cst_16 = arith.constant dense<0.000000e+00> : vector<12x136xf32>
    %25 = tpu.matmul %24, %23, %cst_16 {dimension_numbers = #tpu.dot_dimension_numbers<[1], [0], [0], [1], [0, 0, 1, 1], [], []>} : vector<12x17xf32>, vector<17x136xf32>, vector<12x136xf32> -> vector<12x136xf32>
    %26 = vector.extract_strided_slice %25 {offsets = [0, 0], sizes = [10, 136], strides = [1, 1]} : vector<12x136xf32> to vector<10x136xf32>
    %c0_17 = arith.constant 0 : index
    %c0_18 = arith.constant 0 : index
    %27 = vector.load %arg6[%c0_17, %c0_18] : memref<24x432xf32, #tpu.memory_space<vmem>>, vector<10x136xf32>
    tpu.vector_store %arg6[%c0_17, %c0_18], %26 {strides = array<i32>} : memref<24x432xf32, #tpu.memory_space<vmem>>, vector<10x136xf32>,
    %28 = vector.extract_strided_slice %25 {offsets = [1, 0], sizes = [10, 136], strides = [1, 1]} : vector<12x136xf32> to vector<10x136xf32>
    %c0_19 = arith.constant 0 : index
    %c136 = arith.constant 136 : index
    %29 = vector.load %arg6[%c0_19, %c136] : memref<24x432xf32, #tpu.memory_space<vmem>>, vector<10x136xf32>
    tpu.vector_store %arg6[%c0_19, %c136], %28 {strides = array<i32>} : memref<24x432xf32, #tpu.memory_space<vmem>>, vector<10x136xf32>,
    %30 = vector.extract_strided_slice %25 {offsets = [2, 0], sizes = [10, 136], strides = [1, 1]} : vector<12x136xf32> to vector<10x136xf32>
    %c0_20 = arith.constant 0 : index
    %c272 = arith.constant 272 : index
    %31 = vector.load %arg6[%c0_20, %c272] : memref<24x432xf32, #tpu.memory_space<vmem>>, vector<10x136xf32>
    tpu.vector_store %arg6[%c0_20, %c272], %30 {strides = array<i32>} : memref<24x432xf32, #tpu.memory_space<vmem>>, vector<10x136xf32>,
    %c48 = arith.constant 48 : index
    %c0_21 = arith.constant 0 : index
    %32 = vector.load %arg2[%c48, %c0_21] : memref<896x192xf32, #tpu.memory_space<vmem>>, vector<408x160xf32>
    %c889 = arith.constant 889 : index
    %c0_22 = arith.constant 0 : index
    %33 = vector.load %arg2[%c889, %c0_22] : memref<896x192xf32, #tpu.memory_space<vmem>>, vector<1x160xf32>
    %c0_23 = arith.constant 0 : index
    %c0_24 = arith.constant 0 : index
    %34 = vector.load %arg6[%c0_23, %c0_24] : memref<24x432xf32, #tpu.memory_space<vmem>>, vector<10x408xf32>
    %cst_25 = arith.constant dense<0.000000e+00> : vector<10x160xf32>
    %35 = tpu.matmul %34, %32, %cst_25 {dimension_numbers = #tpu.dot_dimension_numbers<[1], [0], [0], [1], [0, 0, 1, 1], [], []>} : vector<10x408xf32>, vector<408x160xf32>, vector<10x160xf32> -> vector<10x160xf32>
    %36 = vector.broadcast %33 : vector<1x160xf32> to vector<10x160xf32>
    %37 = arith.addf %35, %36 : vector<10x160xf32>
    %cst_26 = arith.constant 0.000000e+00 : f32
    %38 = vector.broadcast %cst_26 : f32 to vector<10x160xf32>
    %39 = arith.maximumf %37, %38 : vector<10x160xf32>
    %40 = vector.extract_strided_slice %39 {offsets = [0, 0], sizes = [10, 144], strides = [1, 1]} : vector<10x160xf32> to vector<10x144xf32>
    %41 = vector.extract_strided_slice %39 {offsets = [0, 16], sizes = [10, 144], strides = [1, 1]} : vector<10x160xf32> to vector<10x144xf32>
    %42 = arith.maximumf %40, %41 : vector<10x144xf32>
    %43 = vector.extract_strided_slice %42 {offsets = [0, 0], sizes = [9, 144], strides = [1, 1]} : vector<10x144xf32> to vector<9x144xf32>
    %44 = vector.extract_strided_slice %42 {offsets = [1, 0], sizes = [9, 144], strides = [1, 1]} : vector<10x144xf32> to vector<9x144xf32>
    %45 = arith.maximumf %43, %44 : vector<9x144xf32>
    %c40 = arith.constant 40 : index
    %c0_27 = arith.constant 0 : index
    %46 = vector.load %arg3[%c40, %c0_27] : memref<56x17xf32, #tpu.memory_space<vmem>>, vector<8x9xf32>
    %cst_28 = arith.constant dense<0.000000e+00> : vector<8x144xf32>
    %47 = tpu.matmul %46, %45, %cst_28 {dimension_numbers = #tpu.dot_dimension_numbers<[1], [0], [0], [1], [0, 0, 1, 1], [], []>} : vector<8x9xf32>, vector<9x144xf32>, vector<8x144xf32> -> vector<8x144xf32>
    %48 = vector.extract_strided_slice %47 {offsets = [0, 0], sizes = [6, 144], strides = [1, 1]} : vector<8x144xf32> to vector<6x144xf32>
    %c0_29 = arith.constant 0 : index
    %c0_30 = arith.constant 0 : index
    %49 = vector.load %arg6[%c0_29, %c0_30] : memref<24x432xf32, #tpu.memory_space<vmem>>, vector<6x144xf32>
    tpu.vector_store %arg6[%c0_29, %c0_30], %48 {strides = array<i32>} : memref<24x432xf32, #tpu.memory_space<vmem>>, vector<6x144xf32>,
    %50 = vector.extract_strided_slice %47 {offsets = [1, 0], sizes = [6, 144], strides = [1, 1]} : vector<8x144xf32> to vector<6x144xf32>
    %c0_31 = arith.constant 0 : index
    %c144 = arith.constant 144 : index
    %51 = vector.load %arg6[%c0_31, %c144] : memref<24x432xf32, #tpu.memory_space<vmem>>, vector<6x144xf32>
    tpu.vector_store %arg6[%c0_31, %c144], %50 {strides = array<i32>} : memref<24x432xf32, #tpu.memory_space<vmem>>, vector<6x144xf32>,
    %52 = vector.extract_strided_slice %47 {offsets = [2, 0], sizes = [6, 144], strides = [1, 1]} : vector<8x144xf32> to vector<6x144xf32>
    %c0_32 = arith.constant 0 : index
    %c288 = arith.constant 288 : index
    %53 = vector.load %arg6[%c0_32, %c288] : memref<24x432xf32, #tpu.memory_space<vmem>>, vector<6x144xf32>
    tpu.vector_store %arg6[%c0_32, %c288], %52 {strides = array<i32>} : memref<24x432xf32, #tpu.memory_space<vmem>>, vector<6x144xf32>,
    %c456 = arith.constant 456 : index
    %c0_33 = arith.constant 0 : index
    %54 = vector.load %arg2[%c456, %c0_33] : memref<896x192xf32, #tpu.memory_space<vmem>>, vector<432x192xf32>
    %c890 = arith.constant 890 : index
    %c0_34 = arith.constant 0 : index
    %55 = vector.load %arg2[%c890, %c0_34] : memref<896x192xf32, #tpu.memory_space<vmem>>, vector<1x192xf32>
    %c0_35 = arith.constant 0 : index
    %c0_36 = arith.constant 0 : index
    %56 = vector.load %arg6[%c0_35, %c0_36] : memref<24x432xf32, #tpu.memory_space<vmem>>, vector<6x432xf32>
    %cst_37 = arith.constant dense<0.000000e+00> : vector<6x192xf32>
    %57 = tpu.matmul %56, %54, %cst_37 {dimension_numbers = #tpu.dot_dimension_numbers<[1], [0], [0], [1], [0, 0, 1, 1], [], []>} : vector<6x432xf32>, vector<432x192xf32>, vector<6x192xf32> -> vector<6x192xf32>
    %58 = vector.broadcast %55 : vector<1x192xf32> to vector<6x192xf32>
    %59 = arith.addf %57, %58 : vector<6x192xf32>
    %cst_38 = arith.constant 0.000000e+00 : f32
    %60 = vector.broadcast %cst_38 : f32 to vector<6x192xf32>
    %61 = arith.maximumf %59, %60 : vector<6x192xf32>
    %62 = vector.extract_strided_slice %61 {offsets = [0, 0], sizes = [6, 160], strides = [1, 1]} : vector<6x192xf32> to vector<6x160xf32>
    %63 = vector.extract_strided_slice %61 {offsets = [0, 32], sizes = [6, 160], strides = [1, 1]} : vector<6x192xf32> to vector<6x160xf32>
    %64 = arith.maximumf %62, %63 : vector<6x160xf32>
    %65 = vector.extract_strided_slice %64 {offsets = [0, 0], sizes = [5, 160], strides = [1, 1]} : vector<6x160xf32> to vector<5x160xf32>
    %66 = vector.extract_strided_slice %64 {offsets = [1, 0], sizes = [5, 160], strides = [1, 1]} : vector<6x160xf32> to vector<5x160xf32>
    %67 = arith.maximumf %65, %66 : vector<5x160xf32>
    %c0_39 = arith.constant 0 : index
    %c0_40 = arith.constant 0 : index
    %68 = vector.load %arg4[%c0_39, %c0_40] : memref<232x128xf32, #tpu.memory_space<vmem>>, vector<160x128xf32>
    %cst_41 = arith.constant dense<0.000000e+00> : vector<5x128xf32>
    %69 = tpu.matmul %67, %68, %cst_41 {dimension_numbers = #tpu.dot_dimension_numbers<[1], [0], [0], [1], [0, 0, 1, 1], [], []>} : vector<5x160xf32>, vector<160x128xf32>, vector<5x128xf32> -> vector<5x128xf32>
    %c48_42 = arith.constant 48 : index
    %c0_43 = arith.constant 0 : index
    %70 = vector.load %arg3[%c48_42, %c0_43] : memref<56x17xf32, #tpu.memory_space<vmem>>, vector<2x5xf32>
    %cst_44 = arith.constant dense<0.000000e+00> : vector<2x128xf32>
    %71 = tpu.matmul %70, %69, %cst_44 {dimension_numbers = #tpu.dot_dimension_numbers<[1], [0], [0], [1], [0, 0, 1, 1], [], []>} : vector<2x5xf32>, vector<5x128xf32>, vector<2x128xf32> -> vector<2x128xf32>
    %72 = vector.extract_strided_slice %71 {offsets = [0, 0], sizes = [1, 64], strides = [1, 1]} : vector<2x128xf32> to vector<1x64xf32>
    %73 = vector.extract_strided_slice %71 {offsets = [1, 64], sizes = [1, 64], strides = [1, 1]} : vector<2x128xf32> to vector<1x64xf32>
    %74 = arith.addf %72, %73 : vector<1x64xf32>
    %c160 = arith.constant 160 : index
    %c0_45 = arith.constant 0 : index
    %75 = vector.load %arg4[%c160, %c0_45] : memref<232x128xf32, #tpu.memory_space<vmem>>, vector<1x64xf32>
    %76 = arith.addf %74, %75 : vector<1x64xf32>
    %cst_46 = arith.constant 0.000000e+00 : f32
    %77 = vector.broadcast %cst_46 : f32 to vector<1x64xf32>
    %78 = arith.maximumf %76, %77 : vector<1x64xf32>
    %c168 = arith.constant 168 : index
    %c0_47 = arith.constant 0 : index
    %79 = vector.load %arg4[%c168, %c0_47] : memref<232x128xf32, #tpu.memory_space<vmem>>, vector<64x1xf32>
    %c161 = arith.constant 161 : index
    %c0_48 = arith.constant 0 : index
    %80 = vector.load %arg4[%c161, %c0_48] : memref<232x128xf32, #tpu.memory_space<vmem>>, vector<1x1xf32>
    %cst_49 = arith.constant dense<0.000000e+00> : vector<1x1xf32>
    %81 = tpu.matmul %78, %79, %cst_49 {dimension_numbers = #tpu.dot_dimension_numbers<[1], [0], [0], [1], [0, 0, 1, 1], [], []>} : vector<1x64xf32>, vector<64x1xf32>, vector<1x1xf32> -> vector<1x1xf32>
    %82 = arith.addf %81, %80 : vector<1x1xf32>
    %cst_50 = arith.constant -1.500000e+01 : f32
    %cst_51 = arith.constant 1.500000e+01 : f32
    %83 = vector.broadcast %cst_50 : f32 to vector<1x1xf32>
    %84 = arith.maximumf %83, %82 : vector<1x1xf32>
    %85 = vector.broadcast %cst_51 : f32 to vector<1x1xf32>
    %86 = arith.minimumf %85, %84 : vector<1x1xf32>
    %cst_52 = arith.constant 0.000000e+00 : f32
    %87 = vector.broadcast %cst_52 : f32 to vector<1x1xf32>
    %88 = arith.subf %87, %86 : vector<1x1xf32>
    %89 = math.exp %88 : vector<1x1xf32>
    %cst_53 = arith.constant 1.000000e+00 : f32
    %90 = vector.broadcast %cst_53 : f32 to vector<1x1xf32>
    %91 = arith.addf %90, %89 : vector<1x1xf32>
    %cst_54 = arith.constant 1.000000e+00 : f32
    %92 = vector.broadcast %cst_54 : f32 to vector<1x1xf32>
    %93 = arith.divf %92, %91 : vector<1x1xf32>
    %c0_55 = arith.constant 0 : index
    %c0_56 = arith.constant 0 : index
    %c0_57 = arith.constant 0 : index
    %94 = vector.load %arg5[%c0_55, %c0_56, %c0_57] : memref<1x1x1xf32, #tpu.memory_space<vmem>>, vector<1x1x1xf32>
    %95 = vector.shape_cast %94 : vector<1x1x1xf32> to vector<1x1xf32>
    %96 = vector.shape_cast %93 : vector<1x1xf32> to vector<1x1x1xf32>
    tpu.vector_store %arg5[%c0_55, %c0_56, %c0_57], %96 {strides = array<i32>} : memref<1x1x1xf32, #tpu.memory_space<vmem>>, vector<1x1x1xf32>,
    return
  }
  func.func @transform_0(%arg0: i32) -> (i32, i32, i32) {
    %c0_i32 = arith.constant 0 : i32
    %c0_i32_0 = arith.constant 0 : i32
    %c0_i32_1 = arith.constant 0 : i32
    return %arg0, %c0_i32, %c0_i32_0 : i32, i32, i32
  }
  func.func @transform_1(%arg0: i32) -> (i32, i32) {
    %c0_i32 = arith.constant 0 : i32
    %c0_i32_0 = arith.constant 0 : i32
    %c0_i32_1 = arith.constant 0 : i32
    return %c0_i32, %c0_i32_0 : i32, i32
  }
  func.func @transform_2(%arg0: i32) -> (i32, i32) {
    %c0_i32 = arith.constant 0 : i32
    %c0_i32_0 = arith.constant 0 : i32
    %c0_i32_1 = arith.constant 0 : i32
    return %c0_i32, %c0_i32_0 : i32, i32
  }
  func.func @transform_3(%arg0: i32) -> (i32, i32) {
    %c0_i32 = arith.constant 0 : i32
    %c0_i32_0 = arith.constant 0 : i32
    %c0_i32_1 = arith.constant 0 : i32
    return %c0_i32, %c0_i32_0 : i32, i32
  }
  func.func @transform_4(%arg0: i32) -> (i32, i32, i32) {
    %c0_i32 = arith.constant 0 : i32
    %c0_i32_0 = arith.constant 0 : i32
    %c0_i32_1 = arith.constant 0 : i32
    return %arg0, %c0_i32, %c0_i32_0 : i32, i32, i32
  }
}

</mosaic_0001>

<llo_original>
// kernel: forward.1
$region0: #{forward.1}
  #allocation0 [shape = 'u32[]', space=smem, size = 0x4, offset = 0x4, fixed_abs, tag = 'smem constant byte address 0x4 - core index']
  #allocation1 [shape = 'u32[144,128]{1,0:T(1,128)}', space=vmem, size = 0x12000, scoped, tag = 'internal scratch']
  #allocation2 [shape = 'f32[24,432]{1,0:T(8,128)}', space=vmem, size = 0xc000, scoped, tag = 'scratch operand']
  %s0 = inlined_call_operand.hbm [shape: f32[2,16,16], index: 0, kind: input, shape index: {}]
  %s1 = inlined_call_operand.hbm [shape: f32[896,192], index: 1, kind: input, shape index: {}]
  %s2 = inlined_call_operand.hbm [shape: f32[56,17], index: 2, kind: input, shape index: {}]
  %s3 = inlined_call_operand.hbm [shape: f32[232,128], index: 3, kind: input, shape index: {}]
  %s4 = inlined_call_operand.vmem [shape: f32[2,1,1], index: 4, kind: output, shape index: {}]
  %s5 = sld [smem:[#allocation0]]
  $region65: #{forward.1} parent=0
    _
  %s7 = ssub.s32 1, %s5
  %s8 = scalar_select 0, %s7, %s5
  $region1: #{forward.1} parent=0
    #allocation3 [shape = 'u8[16384]{0}', space=vmem, size = 0x4000, scoped, tag = 'input window, operand 0']
    #allocation4 [shape = 's32[2]{0}', space=sflag, size = 0x8, scoped, tag = 'scoped memory for forward.1']
    #allocation5 [shape = 'u8[917504]{0}', space=vmem, size = 0xe0000, scoped, tag = 'input window, operand 1, single buffered']
    #allocation6 [shape = 's32[1]{0}', space=sflag, size = 0x4, scoped, tag = 'scoped memory for forward.1']
    #allocation7 [shape = 'u8[28672]{0}', space=vmem, size = 0x7000, scoped, tag = 'input window, operand 2, single buffered']
    #allocation8 [shape = 'u8[118784]{0}', space=vmem, size = 0x1d000, scoped, tag = 'input window, operand 3, single buffered']
    #allocation9 [shape = 's32[1]{0}', space=sflag, size = 0x4, scoped, tag = 'scoped memory for forward.1']
    %9 = vsyncpa [#allocation4], 0
    %s10 = scalar_lea.sflag [#allocation4], 1
    %11 = vsyncpa %s10, 0
    %12 = vsyncpa [#allocation6], 0
    %13 = vsyncpa [#allocation9], 0
    loop: start=0, step=1, limit=4
    $region2: #{forward.1} parent=1 // loop_pre_header
      _
    $region3: #{forward.1} parent=1 // loop_header
      %s15 = sphi 0, %s19
      %p16 = scmp.ge.s32.totalorder %s15, 4
      %s25 = sphi 0, %s27
      %s28 = sphi 0, %s25
      %s29 = sphi 0, %s28
      %s45 = sphi 0, %s29
      %s49 = sphi 0, %s49
      %s51 = sphi 0, %s49
      %s52 = sphi 0, %s51
      %s66 = sphi 0, %s52
      %s70 = sphi 0, %s70
      %s72 = sphi 0, %s70
      %s73 = sphi 0, %s72
      %s87 = sphi 0, %s73
      %s91 = sphi 0, %s91
      %s93 = sphi 0, %s91
      %s94 = sphi 0, %s93
      %s108 = sphi 0, %s94
      %s114 = sphi 0, %s116
      %s117 = sphi 0, %s114
      %s118 = sphi 0, %s117
      %s134 = sphi 0, %s118
    $region4: #{forward.1} parent=1 // loop_header_branch
      %18 = sbr.rel (%p16) target = $region8
    $region5: #{forward.1} parent=1 // loop_body
      %s20 = ssub.s32 %s15, 1
      %s21 = ssub.s32 %s15, 2
      %s22 = sadd.s32 %s15, 1
      %s23 = ssub.s32 %s15, %s22
      %p24 = scmp.eq.s32.totalorder %s23, 0
      %s26 = sadd.s32 %s25, 1
      %s27 = scalar_select %p24, %s25, %s26
      %p30 = pneg %p24
      %p31 = scmp.eq.s32.totalorder %s15, 1
      %p32 = por %p30, %p31
      %p33 = scmp.ne.s32.totalorder %s25, %s28
      %p34 = scmp.eq.s32.totalorder %s15, 0
      %p35 = por %p33, %p34
      %p36 = scmp.ne.s32.totalorder %s25, %s28
      %p37 = scmp.eq.s32.totalorder %s20, 1
      %p38 = por %p36, %p37
      %p39 = scmp.ne.s32.totalorder %s28, %s29
      %p40 = scmp.eq.s32.totalorder %s20, 0
      %p41 = por %p39, %p40
      %p42 = scmp.ne.s32.totalorder %s28, %s29
      %p43 = scmp.eq.s32.totalorder %s21, 1
      %p44 = por %p42, %p43
      %p46 = scmp.ne.s32.totalorder %s29, %s45
      %p47 = scmp.eq.s32.totalorder %s21, 0
      %p48 = por %p46, %p47
      %s50 = sadd.s32 %s49, 1
      %p53 = scmp.eq.s32.totalorder %s15, 1
      %p54 = scmp.ne.s32.totalorder %s49, %s51
      %p55 = scmp.eq.s32.totalorder %s15, 0
      %p56 = por %p54, %p55
      %p57 = scmp.ne.s32.totalorder %s49, %s51
      %p58 = scmp.eq.s32.totalorder %s20, 1
      %p59 = por %p57, %p58
      %p60 = scmp.ne.s32.totalorder %s51, %s52
      %p61 = scmp.eq.s32.totalorder %s20, 0
      %p62 = por %p60, %p61
      %p63 = scmp.ne.s32.totalorder %s51, %s52
      %p64 = scmp.eq.s32.totalorder %s21, 1
      %p65 = por %p63, %p64
      %p67 = scmp.ne.s32.totalorder %s52, %s66
      %p68 = scmp.eq.s32.totalorder %s21, 0
      %p69 = por %p67, %p68
      %s71 = sadd.s32 %s70, 1
      %p74 = scmp.eq.s32.totalorder %s15, 1
      %p75 = scmp.ne.s32.totalorder %s70, %s72
      %p76 = scmp.eq.s32.totalorder %s15, 0
      %p77 = por %p75, %p76
      %p78 = scmp.ne.s32.totalorder %s70, %s72
      %p79 = scmp.eq.s32.totalorder %s20, 1
      %p80 = por %p78, %p79
      %p81 = scmp.ne.s32.totalorder %s72, %s73
      %p82 = scmp.eq.s32.totalorder %s20, 0
      %p83 = por %p81, %p82
      %p84 = scmp.ne.s32.totalorder %s72, %s73
      %p85 = scmp.eq.s32.totalorder %s21, 1
      %p86 = por %p84, %p85
      %p88 = scmp.ne.s32.totalorder %s73, %s87
      %p89 = scmp.eq.s32.totalorder %s21, 0
      %p90 = por %p88, %p89
      %s92 = sadd.s32 %s91, 1
      %p95 = scmp.eq.s32.totalorder %s15, 1
      %p96 = scmp.ne.s32.totalorder %s91, %s93
      %p97 = scmp.eq.s32.totalorder %s15, 0
      %p98 = por %p96, %p97
      %p99 = scmp.ne.s32.totalorder %s91, %s93
      %p100 = scmp.eq.s32.totalorder %s20, 1
      %p101 = por %p99, %p100
      %p102 = scmp.ne.s32.totalorder %s93, %s94
      %p103 = scmp.eq.s32.totalorder %s20, 0
      %p104 = por %p102, %p103
      %p105 = scmp.ne.s32.totalorder %s93, %s94
      %p106 = scmp.eq.s32.totalorder %s21, 1
      %p107 = por %p105, %p106
      %p109 = scmp.ne.s32.totalorder %s94, %s108
      %p110 = scmp.eq.s32.totalorder %s21, 0
      %p111 = por %p109, %p110
      %s112 = ssub.s32 %s15, %s22
      %p113 = scmp.eq.s32.totalorder %s112, 0
      %s115 = sadd.s32 %s114, 1
      %s116 = scalar_select %p113, %s114, %s115
      %p119 = pneg %p113
      %p120 = scmp.eq.s32.totalorder %s15, 1
      %p121 = por %p119, %p120
      %p122 = scmp.ne.s32.totalorder %s114, %s117
      %p123 = scmp.eq.s32.totalorder %s15, 0
      %p124 = por %p122, %p123
      %p125 = scmp.ne.s32.totalorder %s114, %s117
      %p126 = scmp.eq.s32.totalorder %s20, 1
      %p127 = por %p125, %p126
      %p128 = scmp.ne.s32.totalorder %s117, %s118
      %p129 = scmp.eq.s32.totalorder %s20, 0
      %p130 = por %p128, %p129
      %p131 = scmp.ne.s32.totalorder %s117, %s118
      %p132 = scmp.eq.s32.totalorder %s21, 1
      %p133 = por %p131, %p132
      %p135 = scmp.ne.s32.totalorder %s118, %s134
      %p136 = scmp.eq.s32.totalorder %s21, 0
      %p137 = por %p135, %p136
      %p138 = scmp.le.s32.totalorder 1, %s15
      %p139 = scmp.lt.s32.totalorder %s15, 3
      %p140 = pnand %p138, %p139
      %p141 = pneg %p140
      // Predicated region
      $region9: #{forward.1} parent=5 // pred_check
        _
      $region10: #{forward.1} parent=5 // pred_check_branch
        %143 = sbr.rel (%p140) target = $region12
      $region11: #{forward.1} parent=5 // pred_region
        %s144 = ssub.s32 %s15, 1
        // Predicated region
        $region13: #{forward.1} parent=11 // pred_check
          %p145 = pneg %p62
        $region14: #{forward.1} parent=11 // pred_check_branch
          %147 = sbr.rel (%p145) target = $region16
        $region15: #{forward.1} parent=11 // pred_region
          %s149 = ssub.s32 28672, 28672
          %150 = vsyncadd [#allocation6], %s149
          %s151 = sshll.u32 [#allocation5], 4
          %s152 = int_to_ptr.vmem [resolvable:$true] %s151
          %157 = dma.hbm_to_vmem [thread:$0]  %s1, 28672, %s152, [#allocation6], 256, 256, 16
        $region16: #{forward.1} parent=11 // pred_fallthru
          _
        // Predicated region
        $region17: #{forward.1} parent=11 // pred_check
          %p158 = pneg %p83
        $region18: #{forward.1} parent=11 // pred_check_branch
          %160 = sbr.rel (%p158) target = $region20
        $region19: #{forward.1} parent=11 // pred_region
          %s162 = ssub.s32 896, 896
          %163 = vsyncadd [#allocation6], %s162
          %s164 = sshll.u32 [#allocation7], 4
          %s165 = int_to_ptr.vmem [resolvable:$true] %s164
          %170 = dma.hbm_to_vmem [thread:$0]  %s2, 896, %s165, [#allocation6], 128, 128, 8
        $region20: #{forward.1} parent=11 // pred_fallthru
          _
        // Predicated region
        $region21: #{forward.1} parent=11 // pred_check
          %p171 = pneg %p104
        $region22: #{forward.1} parent=11 // pred_check_branch
          %173 = sbr.rel (%p171) target = $region24
        $region23: #{forward.1} parent=11 // pred_region
          %s175 = ssub.s32 3712, 3712
          %176 = vsyncadd [#allocation9], %s175
          %s177 = sshll.u32 [#allocation8], 4
          %s178 = int_to_ptr.vmem [resolvable:$true] %s177
          %183 = dma.hbm_to_vmem [thread:$0]  %s3, 3712, %s178, [#allocation9], 128, 128, 8
        $region24: #{forward.1} parent=11 // pred_fallthru
          _
      $region12: #{forward.1} parent=5 // pred_fallthru
        _
      %p184 = scmp.lt.s32.totalorder %s15, 2
      // Predicated region
      $region25: #{forward.1} parent=5 // pred_check
        %p185 = pneg %p184
      $region26: #{forward.1} parent=5 // pred_check_branch
        %187 = sbr.rel (%p185) target = $region28
      $region27: #{forward.1} parent=5 // pred_region
        // Predicated region
        $region29: #{forward.1} parent=27 // pred_check
          %p188 = pneg %p35
        $region30: #{forward.1} parent=27 // pred_check_branch
          %190 = sbr.rel (%p188) target = $region32
        $region31: #{forward.1} parent=27 // pred_region
          %s191 = sand.u32 %s25, 1
          %s192 = scalar_lea.sflag [#allocation4], %s191
          %s193 = sand.u32 %s25, 1
          %s194 = smul.addr %s193, 16
          %s195 = scalar_lea.vmem [#allocation3], %s194
          %s197 = ssub.s32 256, 256
          %198 = vsyncadd %s192, %s197
          %s199 = smul.addr %s15, 2
          %s200 = smul.addr %s199, 128
          %s201 = scalar_lea.hbm %s0, %s200
          %s202 = sshll.u32 %s195, 4
          %s203 = int_to_ptr.vmem [resolvable:$true] %s202
          %208 = dma.hbm_to_vmem [thread:$0]  %s201, 256, %s203, %s192, 128, 128, 8
        $region32: #{forward.1} parent=27 // pred_fallthru
          _
      $region28: #{forward.1} parent=5 // pred_fallthru
        _
      %p209 = scmp.le.s32.totalorder 1, %s15
      %p210 = scmp.lt.s32.totalorder %s15, 3
      %p211 = pnand %p209, %p210
      %p212 = pneg %p211
      // Predicated region
      $region33: #{forward.1} parent=5 // pred_check
        _
      $region34: #{forward.1} parent=5 // pred_check_branch
        %214 = sbr.rel (%p211) target = $region36
      $region35: #{forward.1} parent=5 // pred_region
        %s215 = ssub.s32 %s15, 1
        %s216 = sand.u32 %s28, 1
        %s217 = scalar_lea.sflag [#allocation4], %s216
        %s218 = sand.u32 %s28, 1
        %s219 = smul.addr %s218, 16
        %s220 = scalar_lea.vmem [#allocation3], %s219
        // Predicated region
        $region37: #{forward.1} parent=35 // pred_check
          %p221 = pneg %p41
        $region38: #{forward.1} parent=35 // pred_check_branch
          %223 = sbr.rel (%p221) target = $region40
        $region39: #{forward.1} parent=35 // pred_region
          %224 = dma.done %s217, 256
        $region40: #{forward.1} parent=35 // pred_fallthru
          _
        // Predicated region
        $region41: #{forward.1} parent=35 // pred_check
          %p225 = pneg %p62
        $region42: #{forward.1} parent=35 // pred_check_branch
          %227 = sbr.rel (%p225) target = $region44
        $region43: #{forward.1} parent=35 // pred_region
          %228 = dma.done [#allocation6], 28672
        $region44: #{forward.1} parent=35 // pred_fallthru
          _
        // Predicated region
        $region45: #{forward.1} parent=35 // pred_check
          %p229 = pneg %p83
        $region46: #{forward.1} parent=35 // pred_check_branch
          %231 = sbr.rel (%p229) target = $region48
        $region47: #{forward.1} parent=35 // pred_region
          %232 = dma.done [#allocation6], 896
        $region48: #{forward.1} parent=35 // pred_fallthru
          _
        // Predicated region
        $region49: #{forward.1} parent=35 // pred_check
          %p233 = pneg %p104
        $region50: #{forward.1} parent=35 // pred_check_branch
          %235 = sbr.rel (%p233) target = $region52
        $region51: #{forward.1} parent=35 // pred_region
          %236 = dma.done [#allocation9], 3712
        $region52: #{forward.1} parent=35 // pred_fallthru
          _
        %s237 = sand.u32 %s28, 1
        %s238 = scalar_lea.sflag [#allocation4], %s237
        %s239 = sand.u32 %s28, 1
        %s240 = smul.addr %s239, 16
        %s241 = scalar_lea.vmem [#allocation3], %s240
        %p242 = pneg %p41
        %p243 = pneg %p38
        %p244 = pneg %p62
        %p245 = pneg %p59
        %p246 = pneg %p83
        %p247 = pneg %p80
        %p248 = pneg %p104
        %p249 = pneg %p101
        %p250 = pneg %p130
        %p251 = pneg %p127
        %p252 = scmp.lt.s32.totalorder %s20, 1
        %s253 = scalar_select %p252, %s20, 1
        %s254 = scalar_lea.vmem %s4, %s253
        %p255 = scmp.lt.s32.totalorder %s20, 1
        %s256 = scalar_select %p255, %s20, 1
        %s257 = scalar_lea.vmem %s4, %s256
        %v258 = vld [vmem:[#allocation7] sm:$0xff]
        %v259 = vld [vmem:[#allocation7 + $0x8] sm:$0xff]
        %v260 = vld [vmem:[#allocation7 + $0x10] sm:$0xf]
        %v261 = vld [vmem:[%s220] sm:$0xff]
        %v262 = vld [vmem:[%s220 + $0x8] sm:$0xff]
        %vm263 = vcmask 130048
        %v265 = vsel %vm263, %v258, 0
        %v268 = vsel %vm263, %v259, 0
        %v271 = vsel %vm263, %v260, 0
        %273 = vmatprep.subr.mxu0 0.0
        %274 = vmatpush1.msra.mxu0 %v261
        %275 = vmatprep.subr.mxu0 0.0
        %276 = vmatpush1.msra.mxu0 %v262
        %277 = vmatprep.subr.mxu0 0.0
        %278 = vmatpush1.msra.mxu0 0.0
        %279 = vmatprep.subr.mxu0 0.0
        %280 = vmatpush1.msra.mxu0 0.0
        %281 = vmatprep.subr.mxu0 0.0
        %282 = vmatpush1.msra.mxu0 0.0
        %283 = vmatprep.subr.mxu0 0.0
        %284 = vmatpush1.msra.mxu0 0.0
        %285 = vmatprep.subr.mxu0 0.0
        %286 = vmatpush1.msra.mxu0 0.0
        %287 = vmatprep.subr.mxu0 0.0
        %288 = vmatpush1.msra.mxu0 0.0
        %289 = vmatprep.subr.mxu0 0.0
        %290 = vmatpush1.msra.mxu0 0.0
        %291 = vmatprep.subr.mxu0 0.0
        %292 = vmatpush1.msra.mxu0 0.0
        %293 = vmatprep.subr.mxu0 0.0
        %294 = vmatpush1.msra.mxu0 0.0
        %295 = vmatprep.subr.mxu0 0.0
        %296 = vmatpush1.msra.mxu0 0.0
        %297 = vmatprep.subr.mxu0 0.0
        %298 = vmatpush1.msra.mxu0 0.0
        %299 = vmatprep.subr.mxu0 0.0
        %300 = vmatpush1.msra.mxu0 0.0
        %301 = vmatprep.subr.mxu0 0.0
        %302 = vmatpush1.msra.mxu0 0.0
        %303 = vmatprep.subr.mxu0 0.0
        %304 = vmatpush1.msra.mxu0 0.0
        %305 = vmatprep.subr.mxu0 0.0
        %306 = vmatpush1.msra.mxu0 0.0
        %307 = vmatprep.subr.mxu0 0.0
        %308 = vmatpush1.msra.mxu0 0.0
        %309 = vmatprep.subr.mxu0 0.0
        %310 = vmatpush1.msra.mxu0 0.0
        %311 = vmatprep.subr.mxu0 0.0
        %312 = vmatpush1.msra.mxu0 0.0
        %313 = vmatprep.subr.mxu0 0.0
        %314 = vmatpush1.msra.mxu0 0.0
        %315 = vmatprep.subr.mxu0 0.0
        %316 = vmatpush1.msra.mxu0 0.0
        %317 = vmatprep.subr.mxu0 0.0
        %318 = vmatpush1.msra.mxu0 0.0
        %319 = vmatprep.subr.mxu0 0.0
        %320 = vmatpush1.msra.mxu0 0.0
        %321 = vmatprep.subr.mxu0 0.0
        %322 = vmatpush1.msra.mxu0 0.0
        %323 = vmatprep.subr.mxu0 0.0
        %324 = vmatpush1.msra.mxu0 0.0
        %325 = vmatprep.subr.mxu0 0.0
        %326 = vmatpush1.msra.mxu0 0.0
        %327 = vmatprep.subr.mxu0 0.0
        %328 = vmatpush1.msra.mxu0 0.0
        %329 = vmatprep.subr.mxu0 0.0
        %330 = vmatpush1.msra.mxu0 0.0
        %331 = vmatprep.subr.mxu0 0.0
        %332 = vmatpush1.msra.mxu0 0.0
        %333 = vmatprep.subr.mxu0 0.0
        %334 = vmatpush1.msra.mxu0 0.0
        %335 = vmatprep.subr.mxu0 0.0
        %336 = vmatpush1.msra.mxu0 0.0
        %337 = vmatprep.mubr.f32.mxu0 0.0
        %338 = vmatmul.mubr.f32.gmra.mrb[0].mxu0 %v265
        %v339 = vpop.f32.mrb[0].mxu0
        %v340 = vadd.f32 0.0, %v339
        %v341 = vpop.f32.mrb[0].mxu0
        %342 = vmatprep.mubr.f32.mxu0 0.0
        %343 = vmatmul.mubr.f32.gmra.mrb[0].mxu0 %v268
        %v344 = vpop.f32.mrb[0].mxu0
        %v345 = vadd.f32 0.0, %v344
        %v346 = vpop.f32.mrb[0].mxu0
        %347 = vmatprep.mubr.f32.mxu0 0.0
        %348 = vmatmul.mubr.f32.gmra.mrb[0].mxu0 %v271
        %v349 = vpop.f32.mrb[0].mxu0
        %v350 = vadd.f32 0.0, %v349
        %v351 = vpop.f32.mrb[0].mxu0
        %352 = vdwg.mxu0
        %353 = vst.msk [vmem:[#allocation2] sm:$0xff] %vm263, %v340
        %354 = vst.msk [vmem:[#allocation2 + $0x20] sm:$0xff] %vm263, %v345
        %vm355 = vcmask 123904
        %356 = vst.msk [vmem:[#allocation2 + $0x40] sm:$0x3] %vm355, %v350
        %vm360 = vcmask 1046528
        %v361 = vrot.slane %v340, 1
        %v362 = vrot.slane %v345, 1
        %v363 = vsel %vm360, %v361, %v362
        %v364 = vrot.slane %v350, 1
        %v365 = vsel %vm360, %v362, %v364
        %366 = vrot.lane.b32.xlu0 %v363, 16
        %v367 = vpop.permute.xlu0 %366
        %368 = vrot.lane.b32.xlu0 %v365, 16
        %v369 = vpop.permute.xlu0 %368
        %370 = vrot.lane.b32.xlu0 %v364, 16
        %v371 = vpop.permute.xlu0 %370
        %vm375 = vcmask 261248
        %376 = vst.msk [vmem:[#allocation2] sm:$0xff] %vm375, %v367
        %377 = vst.msk [vmem:[#allocation2 + $0x20] sm:$0xff] %vm375, %v369
        %vm378 = vcmask 255104
        %379 = vst.msk [vmem:[#allocation2 + $0x40] sm:$0x3] %vm378, %v371
        %vm380 = vcmask 1045504
        %v381 = vrot.slane %v340, 2
        %v382 = vrot.slane %v345, 2
        %v383 = vsel %vm380, %v381, %v382
        %v384 = vrot.slane %v350, 2
        %v385 = vsel %vm380, %v382, %v384
        %386 = vrot.lane.b32.xlu0 %v383, 32
        %v387 = vpop.permute.xlu0 %386
        %388 = vrot.lane.b32.xlu0 %v385, 32
        %v389 = vpop.permute.xlu0 %388
        %390 = vrot.lane.b32.xlu0 %v384, 32
        %v391 = vpop.permute.xlu0 %390
        %vm395 = vcmask 392448
        %396 = vst.msk [vmem:[#allocation2] sm:$0xff] %vm395, %v387
        %397 = vst.msk [vmem:[#allocation2 + $0x20] sm:$0xff] %vm395, %v389
        %vm398 = vcmask 386304
        %399 = vst.msk [vmem:[#allocation2 + $0x40] sm:$0x3] %vm398, %v391
        %v400 = vld [vmem:[#allocation5] sm:$0xff]
        %v401 = vld [vmem:[#allocation5 + $0x8] sm:$0xff]
        %v402 = vld [vmem:[#allocation5 + $0x10] sm:$0xff]
        %v403 = vld [vmem:[#allocation5 + $0x18] sm:$0xff]
        %v404 = vld [vmem:[#allocation5 + $0x20] sm:$0xff]
        %v405 = vld [vmem:[#allocation5 + $0x28] sm:$0xff]
        %v406 = vld [vmem:[#allocation5 + $0x30] sm:$0xff]
        %v407 = vld [vmem:[#allocation5 + $0x38] sm:$0xff]
        %v408 = vld [vmem:[#allocation5 + $0x40] sm:$0xff]
        %v409 = vld [vmem:[#allocation5 + $0x48] sm:$0xff]
        %v410 = vld [vmem:[#allocation5 + $0x50] sm:$0xff]
        %v411 = vld [vmem:[#allocation5 + $0x58] sm:$0xff]
        %s412 = scalar_lea.vmem [#allocation5], 1776
        %v413 = vld [vmem:[%s412] ss:$8 sm:$0x3]
        %v414 = vld [vmem:[#allocation2] sm:$0xff]
        %v415 = vld [vmem:[#allocation2 + $0x20] sm:$0xff]
        %v416 = vld [vmem:[#allocation2 + $0x40] sm:$0x3]
        %v418 = vlaneseq
        %v419 = vshrl.u32 %v418, 7
        %v420 = vsub.s32 0, %v419
        %v421 = vrot.slane %v413, %v420
        %v422 = vlaneseq
        %v423 = vshrl.u32 %v422, 7
        %v424 = vsub.s32 1, %v423
        %v425 = vrot.slane %v413, %v424
        %vm428 = vcmask 392192
        %v430 = vsel %vm428, %v414, 0
        %v433 = vsel %vm428, %v415, 0
        %v436 = vsel %vm428, %v416, 0
        %438 = vmatprep.subr.mxu0 %v401
        %439 = vmatpush1.msra.mxu0 %v400
        %440 = vmatprep.subr.mxu0 %v403
        %441 = vmatpush1.msra.mxu0 %v402
        %442 = vmatprep.subr.mxu0 %v405
        %443 = vmatpush1.msra.mxu0 %v404
        %444 = vmatprep.subr.mxu0 %v407
        %445 = vmatpush1.msra.mxu0 %v406
        %446 = vmatprep.subr.mxu0 %v409
        %447 = vmatpush1.msra.mxu0 %v408
        %448 = vmatprep.subr.mxu0 %v411
        %449 = vmatpush1.msra.mxu0 %v410
        %450 = vmatprep.subr.mxu0 0.0
        %451 = vmatpush1.msra.mxu0 0.0
        %452 = vmatprep.subr.mxu0 0.0
        %453 = vmatpush1.msra.mxu0 0.0
        %454 = vmatprep.subr.mxu0 0.0
        %455 = vmatpush1.msra.mxu0 0.0
        %456 = vmatprep.subr.mxu0 0.0
        %457 = vmatpush1.msra.mxu0 0.0
        %458 = vmatprep.subr.mxu0 0.0
        %459 = vmatpush1.msra.mxu0 0.0
        %460 = vmatprep.subr.mxu0 0.0
        %461 = vmatpush1.msra.mxu0 0.0
        %462 = vmatprep.subr.mxu0 0.0
        %463 = vmatpush1.msra.mxu0 0.0
        %464 = vmatprep.subr.mxu0 0.0
        %465 = vmatpush1.msra.mxu0 0.0
        %466 = vmatprep.subr.mxu0 0.0
        %467 = vmatpush1.msra.mxu0 0.0
        %468 = vmatprep.subr.mxu0 0.0
        %469 = vmatpush1.msra.mxu0 0.0
        %470 = vmatprep.subr.mxu0 0.0
        %471 = vmatpush1.msra.mxu0 0.0
        %472 = vmatprep.subr.mxu0 0.0
        %473 = vmatpush1.msra.mxu0 0.0
        %474 = vmatprep.subr.mxu0 0.0
        %475 = vmatpush1.msra.mxu0 0.0
        %476 = vmatprep.subr.mxu0 0.0
        %477 = vmatpush1.msra.mxu0 0.0
        %478 = vmatprep.subr.mxu0 0.0
        %479 = vmatpush1.msra.mxu0 0.0
        %480 = vmatprep.subr.mxu0 0.0
        %481 = vmatpush1.msra.mxu0 0.0
        %482 = vmatprep.subr.mxu0 0.0
        %483 = vmatpush1.msra.mxu0 0.0
        %484 = vmatprep.subr.mxu0 0.0
        %485 = vmatpush1.msra.mxu0 0.0
        %486 = vmatprep.subr.mxu0 0.0
        %487 = vmatpush1.msra.mxu0 0.0
        %488 = vmatprep.subr.mxu0 0.0
        %489 = vmatpush1.msra.mxu0 0.0
        %490 = vmatprep.subr.mxu0 0.0
        %491 = vmatpush1.msra.mxu0 0.0
        %492 = vmatprep.subr.mxu0 0.0
        %493 = vmatpush1.msra.mxu0 0.0
        %494 = vmatprep.subr.mxu0 0.0
        %495 = vmatpush1.msra.mxu0 0.0
        %496 = vmatprep.subr.mxu0 0.0
        %497 = vmatpush1.msra.mxu0 0.0
        %498 = vmatprep.subr.mxu0 0.0
        %499 = vmatpush1.msra.mxu0 0.0
        %500 = vmatprep.subr.mxu0 0.0
        %501 = vmatpush1.msra.mxu0 0.0
        %502 = vmatprep.mubr.f32.mxu0 0.0
        %503 = vmatmul.mubr.f32.gmra.mrb[0].mxu0 %v430
        %v504 = vpop.f32.mrb[0].mxu0
        %v505 = vadd.f32 %v421, %v504
        %v506 = vpop.f32.mrb[0].mxu0
        %v507 = vadd.f32 %v425, %v506
        %508 = vmatprep.mubr.f32.mxu0 0.0
        %509 = vmatmul.mubr.f32.gmra.mrb[0].mxu0 %v433
        %v510 = vpop.f32.mrb[0].mxu0
        %v511 = vadd.f32 %v421, %v510
        %v512 = vpop.f32.mrb[0].mxu0
        %v513 = vadd.f32 %v425, %v512
        %514 = vmatprep.mubr.f32.mxu0 0.0
        %515 = vmatmul.mubr.f32.gmra.mrb[0].mxu0 %v436
        %v516 = vpop.f32.mrb[0].mxu0
        %v517 = vadd.f32 %v421, %v516
        %v518 = vpop.f32.mrb[0].mxu0
        %v519 = vadd.f32 %v425, %v518
        %520 = vdwg.mxu0
        %v521 = vmax.f32 %v505, 0.0
        %v522 = vmax.f32 %v507, 0.0
        %v523 = vmax.f32 %v511, 0.0
        %v524 = vmax.f32 %v513, 0.0
        %v525 = vmax.f32 %v517, 0.0
        %v526 = vmax.f32 %v519, 0.0
        %533 = vrot.lane.b32.xlu0 %v521, 120
        %v534 = vpop.permute.xlu0 %533
        %535 = vrot.lane.b32.xlu0 %v522, 120
        %v536 = vpop.permute.xlu0 %535
        %537 = vrot.lane.b32.xlu0 %v523, 120
        %v538 = vpop.permute.xlu0 %537
        %539 = vrot.lane.b32.xlu0 %v524, 120
        %v540 = vpop.permute.xlu0 %539
        %541 = vrot.lane.b32.xlu0 %v525, 120
        %v542 = vpop.permute.xlu0 %541
        %543 = vrot.lane.b32.xlu0 %v526, 120
        %v544 = vpop.permute.xlu0 %543
        %vm545 = vcmask 982016
        %v546 = vsel %vm545, %v534, %v536
        %v547 = vsel %vm545, %v538, %v540
        %v548 = vsel %vm545, %v542, %v544
        %v555 = vmax.f32 %v521, %v546
        %v556 = vmax.f32 %v522, %v536
        %v557 = vmax.f32 %v523, %v547
        %v558 = vmax.f32 %v524, %v540
        %v559 = vmax.f32 %v525, %v548
        %v560 = vmax.f32 %v526, %v544
        %v567 = vrot.slane %v555, 1
        %v568 = vrot.slane %v557, 1
        %v569 = vsel %vm360, %v567, %v568
        %v570 = vrot.slane %v556, 1
        %v571 = vrot.slane %v558, 1
        %v572 = vsel %vm360, %v570, %v571
        %v573 = vrot.slane %v559, 1
        %v574 = vsel %vm360, %v568, %v573
        %v575 = vrot.slane %v560, 1
        %v576 = vsel %vm360, %v571, %v575
        %v583 = vmax.f32 %v555, %v569
        %v584 = vmax.f32 %v556, %v572
        %v585 = vmax.f32 %v557, %v574
        %v586 = vmax.f32 %v558, %v576
        %v587 = vmax.f32 %v559, %v573
        %v588 = vmax.f32 %v560, %v575
        %v589 = vld [vmem:[#allocation7 + $0x18] sm:$0xff]
        %v590 = vld [vmem:[#allocation7 + $0x20] sm:$0xf]
        %vm591 = vcmask 138240
        %v593 = vsel %vm591, %v589, 0
        %v596 = vsel %vm591, %v590, 0
        %vm598 = vcmask 1040384
        %v600 = vsel %vm598, %v587, 0
        %v603 = vsel %vm598, %v588, 0
        %605 = vmatprep.subr.mxu0 %v584
        %606 = vmatpush1.msra.mxu0 %v583
        %607 = vmatprep.subr.mxu0 %v586
        %608 = vmatpush1.msra.mxu0 %v585
        %609 = vmatprep.subr.mxu0 %v603
        %610 = vmatpush1.msra.mxu0 %v600
        %611 = vmatprep.subr.mxu0 0.0
        %612 = vmatpush1.msra.mxu0 0.0
        %613 = vmatprep.subr.mxu0 0.0
        %614 = vmatpush1.msra.mxu0 0.0
        %615 = vmatprep.subr.mxu0 0.0
        %616 = vmatpush1.msra.mxu0 0.0
        %617 = vmatprep.subr.mxu0 0.0
        %618 = vmatpush1.msra.mxu0 0.0
        %619 = vmatprep.subr.mxu0 0.0
        %620 = vmatpush1.msra.mxu0 0.0
        %621 = vmatprep.subr.mxu0 0.0
        %622 = vmatpush1.msra.mxu0 0.0
        %623 = vmatprep.subr.mxu0 0.0
        %624 = vmatpush1.msra.mxu0 0.0
        %625 = vmatprep.subr.mxu0 0.0
        %626 = vmatpush1.msra.mxu0 0.0
        %627 = vmatprep.subr.mxu0 0.0
        %628 = vmatpush1.msra.mxu0 0.0
        %629 = vmatprep.subr.mxu0 0.0
        %630 = vmatpush1.msra.mxu0 0.0
        %631 = vmatprep.subr.mxu0 0.0
        %632 = vmatpush1.msra.mxu0 0.0
        %633 = vmatprep.subr.mxu0 0.0
        %634 = vmatpush1.msra.mxu0 0.0
        %635 = vmatprep.subr.mxu0 0.0
        %636 = vmatpush1.msra.mxu0 0.0
        %637 = vmatprep.subr.mxu0 0.0
        %638 = vmatpush1.msra.mxu0 0.0
        %639 = vmatprep.subr.mxu0 0.0
        %640 = vmatpush1.msra.mxu0 0.0
        %641 = vmatprep.subr.mxu0 0.0
        %642 = vmatpush1.msra.mxu0 0.0
        %643 = vmatprep.subr.mxu0 0.0
        %644 = vmatpush1.msra.mxu0 0.0
        %645 = vmatprep.subr.mxu0 0.0
        %646 = vmatpush1.msra.mxu0 0.0
        %647 = vmatprep.subr.mxu0 0.0
        %648 = vmatpush1.msra.mxu0 0.0
        %649 = vmatprep.subr.mxu0 0.0
        %650 = vmatpush1.msra.mxu0 0.0
        %651 = vmatprep.subr.mxu0 0.0
        %652 = vmatpush1.msra.mxu0 0.0
        %653 = vmatprep.subr.mxu0 0.0
        %654 = vmatpush1.msra.mxu0 0.0
        %655 = vmatprep.subr.mxu0 0.0
        %656 = vmatpush1.msra.mxu0 0.0
        %657 = vmatprep.subr.mxu0 0.0
        %658 = vmatpush1.msra.mxu0 0.0
        %659 = vmatprep.subr.mxu0 0.0
        %660 = vmatpush1.msra.mxu0 0.0
        %661 = vmatprep.subr.mxu0 0.0
        %662 = vmatpush1.msra.mxu0 0.0
        %663 = vmatprep.subr.mxu0 0.0
        %664 = vmatpush1.msra.mxu0 0.0
        %665 = vmatprep.subr.mxu0 0.0
        %666 = vmatpush1.msra.mxu0 0.0
        %667 = vmatprep.subr.mxu0 0.0
        %668 = vmatpush1.msra.mxu0 0.0
        %669 = vmatprep.mubr.f32.mxu0 0.0
        %670 = vmatmul.mubr.f32.gmra.mrb[0].mxu0 %v593
        %v671 = vpop.f32.mrb[0].mxu0
        %v672 = vadd.f32 0.0, %v671
        %v673 = vpop.f32.mrb[0].mxu0
        %v674 = vadd.f32 0.0, %v673
        %675 = vmatprep.mubr.f32.mxu0 0.0
        %676 = vmatmul.mubr.f32.gmra.mrb[0].mxu0 %v596
        %v677 = vpop.f32.mrb[0].mxu0
        %v678 = vadd.f32 0.0, %v677
        %v679 = vpop.f32.mrb[0].mxu0
        %v680 = vadd.f32 0.0, %v679
        %681 = vdwg.mxu0
        %682 = vst [vmem:[#allocation2] sm:$0xff] %v672
        %vm683 = vcmask 64512
        %684 = vst.msk [vmem:[#allocation2 + $0x8] sm:$0xff] %vm683, %v674
        %685 = vst [vmem:[#allocation2 + $0x20] sm:$0x3] %v678
        %vm686 = vcmask 58368
        %687 = vst.msk [vmem:[#allocation2 + $0x28] sm:$0x3] %vm686, %v680
        %v692 = vrot.slane %v672, 1
        %v693 = vrot.slane %v678, 1
        %v694 = vsel %vm360, %v692, %v693
        %v695 = vrot.slane %v674, 1
        %v696 = vrot.slane %v680, 1
        %v697 = vsel %vm360, %v695, %v696
        %698 = vrot.lane.b32.xlu0 %v694, 8
        %v699 = vpop.permute.xlu0 %698
        %700 = vrot.lane.b32.xlu0 %v697, 8
        %v701 = vpop.permute.xlu0 %700
        %702 = vrot.lane.b32.xlu0 %v693, 8
        %v703 = vpop.permute.xlu0 %702
        %704 = vrot.lane.b32.xlu0 %v696, 8
        %v705 = vpop.permute.xlu0 %704
        %v706 = vsel %vm683, %v699, %v701
        %v707 = vsel %vm683, %v703, %v705
        %vm712 = vcmask 1047616
        %713 = vst.msk [vmem:[#allocation2 + $0x8] sm:$0xff] %vm712, %v699
        %714 = vst.msk [vmem:[#allocation2 + $0x10] sm:$0xff] %vm263, %v706
        %vm715 = vcmask 1041472
        %716 = vst.msk [vmem:[#allocation2 + $0x28] sm:$0x3] %vm715, %v703
        %717 = vst.msk [vmem:[#allocation2 + $0x30] sm:$0x3] %vm355, %v707
        %v718 = vrot.slane %v672, 2
        %v719 = vrot.slane %v678, 2
        %v720 = vsel %vm380, %v718, %v719
        %v721 = vrot.slane %v674, 2
        %v722 = vrot.slane %v680, 2
        %v723 = vsel %vm380, %v721, %v722
        %724 = vrot.lane.b32.xlu0 %v720, 16
        %v725 = vpop.permute.xlu0 %724
        %726 = vrot.lane.b32.xlu0 %v723, 16
        %v727 = vpop.permute.xlu0 %726
        %728 = vrot.lane.b32.xlu0 %v719, 16
        %v729 = vpop.permute.xlu0 %728
        %730 = vrot.lane.b32.xlu0 %v722, 16
        %v731 = vpop.permute.xlu0 %730
        %v732 = vsel %vm263, %v725, %v727
        %v733 = vsel %vm263, %v729, %v731
        %vm738 = vcmask 1047680
        %739 = vst.msk [vmem:[#allocation2 + $0x10] sm:$0xff] %vm738, %v725
        %vm740 = vcmask 195584
        %741 = vst.msk [vmem:[#allocation2 + $0x18] sm:$0xff] %vm740, %v732
        %vm742 = vcmask 1041536
        %743 = vst.msk [vmem:[#allocation2 + $0x30] sm:$0x3] %vm742, %v729
        %vm744 = vcmask 189440
        %745 = vst.msk [vmem:[#allocation2 + $0x38] sm:$0x3] %vm744, %v733
        %v746 = vld [vmem:[#allocation5 + $0x60] sm:$0xff]
        %v747 = vld [vmem:[#allocation5 + $0x68] sm:$0xff]
        %v748 = vld [vmem:[#allocation5 + $0x70] sm:$0xff]
        %v749 = vld [vmem:[#allocation5 + $0x78] sm:$0xff]
        %v750 = vld [vmem:[#allocation5 + $0x80] sm:$0xff]
        %v751 = vld [vmem:[#allocation5 + $0x88] sm:$0xff]
        %v752 = vld [vmem:[#allocation5 + $0x90] sm:$0xff]
        %v753 = vld [vmem:[#allocation5 + $0x98] sm:$0xff]
        %v754 = vld [vmem:[#allocation5 + $0xa0] sm:$0xff]
        %v755 = vld [vmem:[#allocation5 + $0xa8] sm:$0xff]
        %v756 = vld [vmem:[#allocation5 + $0xb0] sm:$0xff]
        %v757 = vld [vmem:[#allocation5 + $0xb8] sm:$0xff]
        %v758 = vld [vmem:[#allocation5 + $0xc0] sm:$0xff]
        %v759 = vld [vmem:[#allocation5 + $0xc8] sm:$0xff]
        %v760 = vld [vmem:[#allocation5 + $0xd0] sm:$0xff]
        %v761 = vld [vmem:[#allocation5 + $0xd8] sm:$0xff]
        %v762 = vld [vmem:[#allocation5 + $0xe0] sm:$0xff]
        %v763 = vld [vmem:[#allocation5 + $0xe8] sm:$0xff]
        %v764 = vld [vmem:[#allocation5 + $0xf0] sm:$0xff]
        %v765 = vld [vmem:[#allocation5 + $0xf8] sm:$0xff]
        %v766 = vld [vmem:[#allocation5 + $0x100] sm:$0xff]
        %v767 = vld [vmem:[#allocation5 + $0x108] sm:$0xff]
        %v768 = vld [vmem:[#allocation5 + $0x110] sm:$0xff]
        %v769 = vld [vmem:[#allocation5 + $0x118] sm:$0xff]
        %v770 = vld [vmem:[#allocation5 + $0x120] sm:$0xff]
        %v771 = vld [vmem:[#allocation5 + $0x128] sm:$0xff]
        %v772 = vld [vmem:[#allocation5 + $0x130] sm:$0xff]
        %v773 = vld [vmem:[#allocation5 + $0x138] sm:$0xff]
        %v774 = vld [vmem:[#allocation5 + $0x140] sm:$0xff]
        %v775 = vld [vmem:[#allocation5 + $0x148] sm:$0xff]
        %v776 = vld [vmem:[#allocation5 + $0x150] sm:$0xff]
        %v777 = vld [vmem:[#allocation5 + $0x158] sm:$0xff]
        %v778 = vld [vmem:[#allocation5 + $0x160] sm:$0xff]
        %v779 = vld [vmem:[#allocation5 + $0x168] sm:$0xff]
        %v780 = vld [vmem:[#allocation5 + $0x170] sm:$0xff]
        %v781 = vld [vmem:[#allocation5 + $0x178] sm:$0xff]
        %v782 = vld [vmem:[#allocation5 + $0x180] sm:$0xff]
        %v783 = vld [vmem:[#allocation5 + $0x188] sm:$0xff]
        %v784 = vld [vmem:[#allocation5 + $0x190] sm:$0xff]
        %v785 = vld [vmem:[#allocation5 + $0x198] sm:$0xff]
        %v786 = vld [vmem:[#allocation5 + $0x1a0] sm:$0xff]
        %v787 = vld [vmem:[#allocation5 + $0x1a8] sm:$0xff]
        %v788 = vld [vmem:[#allocation5 + $0x1b0] sm:$0xff]
        %v789 = vld [vmem:[#allocation5 + $0x1b8] sm:$0xff]
        %v790 = vld [vmem:[#allocation5 + $0x1c0] sm:$0xff]
        %v791 = vld [vmem:[#allocation5 + $0x1c8] sm:$0xff]
        %v792 = vld [vmem:[#allocation5 + $0x1d0] sm:$0xff]
        %v793 = vld [vmem:[#allocation5 + $0x1d8] sm:$0xff]
        %v794 = vld [vmem:[#allocation5 + $0x1e0] sm:$0xff]
        %v795 = vld [vmem:[#allocation5 + $0x1e8] sm:$0xff]
        %v796 = vld [vmem:[#allocation5 + $0x1f0] sm:$0xff]
        %v797 = vld [vmem:[#allocation5 + $0x1f8] sm:$0xff]
        %v798 = vld [vmem:[#allocation5 + $0x200] sm:$0xff]
        %v799 = vld [vmem:[#allocation5 + $0x208] sm:$0xff]
        %v800 = vld [vmem:[#allocation5 + $0x210] sm:$0xff]
        %v801 = vld [vmem:[#allocation5 + $0x218] sm:$0xff]
        %v802 = vld [vmem:[#allocation5 + $0x220] sm:$0xff]
        %v803 = vld [vmem:[#allocation5 + $0x228] sm:$0xff]
        %v804 = vld [vmem:[#allocation5 + $0x230] sm:$0xff]
        %v805 = vld [vmem:[#allocation5 + $0x238] sm:$0xff]
        %v806 = vld [vmem:[#allocation5 + $0x240] sm:$0xff]
        %v807 = vld [vmem:[#allocation5 + $0x248] sm:$0xff]
        %v808 = vld [vmem:[#allocation5 + $0x250] sm:$0xff]
        %v809 = vld [vmem:[#allocation5 + $0x258] sm:$0xff]
        %v810 = vld [vmem:[#allocation5 + $0x260] sm:$0xff]
        %v811 = vld [vmem:[#allocation5 + $0x268] sm:$0xff]
        %v812 = vld [vmem:[#allocation5 + $0x270] sm:$0xff]
        %v813 = vld [vmem:[#allocation5 + $0x278] sm:$0xff]
        %v814 = vld [vmem:[#allocation5 + $0x280] sm:$0xff]
        %v815 = vld [vmem:[#allocation5 + $0x288] sm:$0xff]
        %v816 = vld [vmem:[#allocation5 + $0x290] sm:$0xff]
        %v817 = vld [vmem:[#allocation5 + $0x298] sm:$0xff]
        %v818 = vld [vmem:[#allocation5 + $0x2a0] sm:$0xff]
        %v819 = vld [vmem:[#allocation5 + $0x2a8] sm:$0xff]
        %v820 = vld [vmem:[#allocation5 + $0x2b0] sm:$0xff]
        %v821 = vld [vmem:[#allocation5 + $0x2b8] sm:$0xff]
        %v822 = vld [vmem:[#allocation5 + $0x2c0] sm:$0xff]
        %v823 = vld [vmem:[#allocation5 + $0x2c8] sm:$0xff]
        %v824 = vld [vmem:[#allocation5 + $0x2d0] sm:$0xff]
        %v825 = vld [vmem:[#allocation5 + $0x2d8] sm:$0xff]
        %v826 = vld [vmem:[#allocation5 + $0x2e0] sm:$0xff]
        %v827 = vld [vmem:[#allocation5 + $0x2e8] sm:$0xff]
        %v828 = vld [vmem:[#allocation5 + $0x2f0] sm:$0xff]
        %v829 = vld [vmem:[#allocation5 + $0x2f8] sm:$0xff]
        %v830 = vld [vmem:[#allocation5 + $0x300] sm:$0xff]
        %v831 = vld [vmem:[#allocation5 + $0x308] sm:$0xff]
        %v832 = vld [vmem:[#allocation5 + $0x310] sm:$0xff]
        %v833 = vld [vmem:[#allocation5 + $0x318] sm:$0xff]
        %v834 = vld [vmem:[#allocation5 + $0x320] sm:$0xff]
        %v835 = vld [vmem:[#allocation5 + $0x328] sm:$0xff]
        %v836 = vld [vmem:[#allocation5 + $0x330] sm:$0xff]
        %v837 = vld [vmem:[#allocation5 + $0x338] sm:$0xff]
        %v838 = vld [vmem:[#allocation5 + $0x340] sm:$0xff]
        %v839 = vld [vmem:[#allocation5 + $0x348] sm:$0xff]
        %v840 = vld [vmem:[#allocation5 + $0x350] sm:$0xff]
        %v841 = vld [vmem:[#allocation5 + $0x358] sm:$0xff]
        %v842 = vld [vmem:[#allocation5 + $0x360] sm:$0xff]
        %v843 = vld [vmem:[#allocation5 + $0x368] sm:$0xff]
        %v844 = vld [vmem:[#allocation5 + $0x370] sm:$0xff]
        %v845 = vld [vmem:[#allocation5 + $0x378] sm:$0xff]
        %v846 = vld [vmem:[#allocation5 + $0x380] sm:$0xff]
        %v847 = vld [vmem:[#allocation5 + $0x388] sm:$0xff]
        %s848 = scalar_lea.vmem [#allocation5], 1777
        %v849 = vld [vmem:[%s848] ss:$8 sm:$0x3]
        %v850 = vld [vmem:[#allocation2] sm:$0xff]
        %v851 = vld [vmem:[#allocation2 + $0x8] sm:$0xff]
        %v852 = vld [vmem:[#allocation2 + $0x10] sm:$0xff]
        %v853 = vld [vmem:[#allocation2 + $0x18] sm:$0xff]
        %v854 = vld [vmem:[#allocation2 + $0x20] sm:$0x3]
        %v855 = vld [vmem:[#allocation2 + $0x28] sm:$0x3]
        %v856 = vld [vmem:[#allocation2 + $0x30] sm:$0x3]
        %v857 = vld [vmem:[#allocation2 + $0x38] sm:$0x3]
        %v859 = vlaneseq
        %v860 = vshrl.u32 %v859, 7
        %v861 = vsub.s32 0, %v860
        %v862 = vrot.slane %v849, %v861
        %v863 = vlaneseq
        %v864 = vshrl.u32 %v863, 7
        %v865 = vsub.s32 1, %v864
        %v866 = vrot.slane %v849, %v865
        %v870 = vsel %vm740, %v853, 0
        %v873 = vsel %vm740, %v857, 0
        %875 = vmatprep.subr.mxu0 %v747
        %876 = vmatpush1.msra.mxu0 %v746
        %877 = vmatprep.subr.mxu0 %v749
        %878 = vmatpush1.msra.mxu0 %v748
        %879 = vmatprep.subr.mxu0 %v751
        %880 = vmatpush1.msra.mxu0 %v750
        %881 = vmatprep.subr.mxu0 %v753
        %882 = vmatpush1.msra.mxu0 %v752
        %883 = vmatprep.subr.mxu0 %v755
        %884 = vmatpush1.msra.mxu0 %v754
        %885 = vmatprep.subr.mxu0 %v757
        %886 = vmatpush1.msra.mxu0 %v756
        %887 = vmatprep.subr.mxu0 %v759
        %888 = vmatpush1.msra.mxu0 %v758
        %889 = vmatprep.subr.mxu0 %v761
        %890 = vmatpush1.msra.mxu0 %v760
        %891 = vmatprep.subr.mxu0 %v763
        %892 = vmatpush1.msra.mxu0 %v762
        %893 = vmatprep.subr.mxu0 %v765
        %894 = vmatpush1.msra.mxu0 %v764
        %895 = vmatprep.subr.mxu0 %v767
        %896 = vmatpush1.msra.mxu0 %v766
        %897 = vmatprep.subr.mxu0 %v769
        %898 = vmatpush1.msra.mxu0 %v768
        %899 = vmatprep.subr.mxu0 %v771
        %900 = vmatpush1.msra.mxu0 %v770
        %901 = vmatprep.subr.mxu0 %v773
        %902 = vmatpush1.msra.mxu0 %v772
        %903 = vmatprep.subr.mxu0 %v775
        %904 = vmatpush1.msra.mxu0 %v774
        %905 = vmatprep.subr.mxu0 %v777
        %906 = vmatpush1.msra.mxu0 %v776
        %907 = vmatprep.subr.mxu0 %v779
        %908 = vmatpush1.msra.mxu0 %v778
        %909 = vmatprep.subr.mxu0 %v781
        %910 = vmatpush1.msra.mxu0 %v780
        %911 = vmatprep.subr.mxu0 %v783
        %912 = vmatpush1.msra.mxu0 %v782
        %913 = vmatprep.subr.mxu0 %v785
        %914 = vmatpush1.msra.mxu0 %v784
        %915 = vmatprep.subr.mxu0 %v787
        %916 = vmatpush1.msra.mxu0 %v786
        %917 = vmatprep.subr.mxu0 %v789
        %918 = vmatpush1.msra.mxu0 %v788
        %919 = vmatprep.subr.mxu0 %v791
        %920 = vmatpush1.msra.mxu0 %v790
        %921 = vmatprep.subr.mxu0 %v793
        %922 = vmatpush1.msra.mxu0 %v792
        %923 = vmatprep.subr.mxu0 %v795
        %924 = vmatpush1.msra.mxu0 %v794
        %925 = vmatprep.subr.mxu0 %v797
        %926 = vmatpush1.msra.mxu0 %v796
        %927 = vmatprep.subr.mxu0 %v799
        %928 = vmatpush1.msra.mxu0 %v798
        %929 = vmatprep.subr.mxu0 %v801
        %930 = vmatpush1.msra.mxu0 %v800
        %931 = vmatprep.subr.mxu0 %v803
        %932 = vmatpush1.msra.mxu0 %v802
        %933 = vmatprep.subr.mxu0 %v805
        %934 = vmatpush1.msra.mxu0 %v804
        %935 = vmatprep.subr.mxu0 %v807
        %936 = vmatpush1.msra.mxu0 %v806
        %937 = vmatprep.subr.mxu0 %v809
        %938 = vmatpush1.msra.mxu0 %v808
        %939 = vmatprep.mubr.f32.mxu0 %v851
        %940 = vmatmul.mubr.f32.gmra.mrb[0].mxu0 %v850
        %v941 = vpop.f32.mrb[0].mxu0
        %v942 = vadd.f32 %v862, %v941
        %v943 = vpop.f32.mrb[0].mxu0
        %v944 = vadd.f32 %v866, %v943
        %945 = vmatprep.mubr.f32.mxu0 %v855
        %946 = vmatmul.mubr.f32.gmra.mrb[0].mxu0 %v854
        %v947 = vpop.f32.mrb[0].mxu0
        %v948 = vadd.f32 %v862, %v947
        %v949 = vpop.f32.mrb[0].mxu0
        %v950 = vadd.f32 %v866, %v949
        %951 = vdwg.mxu0
        %952 = vmatprep.subr.mxu0 %v811
        %953 = vmatpush1.msra.mxu0 %v810
        %954 = vmatprep.subr.mxu0 %v813
        %955 = vmatpush1.msra.mxu0 %v812
        %956 = vmatprep.subr.mxu0 %v815
        %957 = vmatpush1.msra.mxu0 %v814
        %958 = vmatprep.subr.mxu0 %v817
        %959 = vmatpush1.msra.mxu0 %v816
        %960 = vmatprep.subr.mxu0 %v819
        %961 = vmatpush1.msra.mxu0 %v818
        %962 = vmatprep.subr.mxu0 %v821
        %963 = vmatpush1.msra.mxu0 %v820
        %964 = vmatprep.subr.mxu0 %v823
        %965 = vmatpush1.msra.mxu0 %v822
        %966 = vmatprep.subr.mxu0 %v825
        %967 = vmatpush1.msra.mxu0 %v824
        %968 = vmatprep.subr.mxu0 %v827
        %969 = vmatpush1.msra.mxu0 %v826
        %970 = vmatprep.subr.mxu0 %v829
        %971 = vmatpush1.msra.mxu0 %v828
        %972 = vmatprep.subr.mxu0 %v831
        %973 = vmatpush1.msra.mxu0 %v830
        %974 = vmatprep.subr.mxu0 %v833
        %975 = vmatpush1.msra.mxu0 %v832
        %976 = vmatprep.subr.mxu0 %v835
        %977 = vmatpush1.msra.mxu0 %v834
        %978 = vmatprep.subr.mxu0 %v837
        %979 = vmatpush1.msra.mxu0 %v836
        %980 = vmatprep.subr.mxu0 %v839
        %981 = vmatpush1.msra.mxu0 %v838
        %982 = vmatprep.subr.mxu0 %v841
        %983 = vmatpush1.msra.mxu0 %v840
        %984 = vmatprep.subr.mxu0 %v843
        %985 = vmatpush1.msra.mxu0 %v842
        %986 = vmatprep.subr.mxu0 %v845
        %987 = vmatpush1.msra.mxu0 %v844
        %988 = vmatprep.subr.mxu0 %v847
        %989 = vmatpush1.msra.mxu0 %v846
        %990 = vmatprep.subr.mxu0 0.0
        %991 = vmatpush1.msra.mxu0 0.0
        %992 = vmatprep.subr.mxu0 0.0
        %993 = vmatpush1.msra.mxu0 0.0
        %994 = vmatprep.subr.mxu0 0.0
        %995 = vmatpush1.msra.mxu0 0.0
        %996 = vmatprep.subr.mxu0 0.0
        %997 = vmatpush1.msra.mxu0 0.0
        %998 = vmatprep.subr.mxu0 0.0
        %999 = vmatpush1.msra.mxu0 0.0
        %1000 = vmatprep.subr.mxu0 0.0
        %1001 = vmatpush1.msra.mxu0 0.0
        %1002 = vmatprep.subr.mxu0 0.0
        %1003 = vmatpush1.msra.mxu0 0.0
        %1004 = vmatprep.subr.mxu0 0.0
        %1005 = vmatpush1.msra.mxu0 0.0
        %1006 = vmatprep.subr.mxu0 0.0
        %1007 = vmatpush1.msra.mxu0 0.0
        %1008 = vmatprep.subr.mxu0 0.0
        %1009 = vmatpush1.msra.mxu0 0.0
        %1010 = vmatprep.subr.mxu0 0.0
        %1011 = vmatpush1.msra.mxu0 0.0
        %1012 = vmatprep.subr.mxu0 0.0
        %1013 = vmatpush1.msra.mxu0 0.0
        %1014 = vmatprep.subr.mxu0 0.0
        %1015 = vmatpush1.msra.mxu0 0.0
        %1016 = vmatprep.mubr.f32.mxu0 %v870
        %1017 = vmatmul.mubr.f32.gmra.mrb[0].mxu0 %v852
        %v1018 = vpop.f32.mrb[0].mxu0
        %v1019 = vadd.f32 %v942, %v1018
        %v1020 = vpop.f32.mrb[0].mxu0
        %v1021 = vadd.f32 %v944, %v1020
        %1022 = vmatprep.mubr.f32.mxu0 %v873
        %1023 = vmatmul.mubr.f32.gmra.mrb[0].mxu0 %v856
        %v1024 = vpop.f32.mrb[0].mxu0
        %v1025 = vadd.f32 %v948, %v1024
        %v1026 = vpop.f32.mrb[0].mxu0
        %v1027 = vadd.f32 %v950, %v1026
        %1028 = vdwg.mxu0
        %v1029 = vmax.f32 %v1019, 0.0
        %v1030 = vmax.f32 %v1021, 0.0
        %v1031 = vmax.f32 %v1025, 0.0
        %v1032 = vmax.f32 %v1027, 0.0
        %1037 = vrot.lane.b32.xlu0 %v1029, 112
        %v1038 = vpop.permute.xlu0 %1037
        %1039 = vrot.lane.b32.xlu0 %v1030, 112
        %v1040 = vpop.permute.xlu0 %1039
        %1041 = vrot.lane.b32.xlu0 %v1031, 112
        %v1042 = vpop.permute.xlu0 %1041
        %1043 = vrot.lane.b32.xlu0 %v1032, 112
        %v1044 = vpop.permute.xlu0 %1043
        %vm1045 = vcmask 916480
        %v1046 = vsel %vm1045, %v1038, %v1040
        %v1047 = vsel %vm1045, %v1042, %v1044
        %v1052 = vmax.f32 %v1029, %v1046
        %v1053 = vmax.f32 %v1030, %v1040
        %v1054 = vmax.f32 %v1031, %v1047
        %v1055 = vmax.f32 %v1032, %v1044
        %v1060 = vrot.slane %v1052, 1
        %v1061 = vrot.slane %v1054, 1
        %v1062 = vsel %vm360, %v1060, %v1061
        %v1063 = vrot.slane %v1053, 1
        %v1064 = vrot.slane %v1055, 1
        %v1065 = vsel %vm360, %v1063, %v1064
        %v1070 = vmax.f32 %v1052, %v1062
        %v1071 = vmax.f32 %v1053, %v1065
        %v1072 = vmax.f32 %v1054, %v1061
        %v1073 = vmax.f32 %v1055, %v1064
        %v1074 = vld [vmem:[#allocation7 + $0x28] sm:$0xff]
        %vm1075 = vcmask 72704
        %v1077 = vsel %vm1075, %v1074, 0
        %v1080 = vsel %vm598, %v1072, 0
        %v1083 = vsel %vm598, %v1073, 0
        %1085 = vmatprep.subr.mxu0 %v1071
        %1086 = vmatpush1.msra.mxu0 %v1070
        %1087 = vmatprep.subr.mxu0 %v1083
        %1088 = vmatpush1.msra.mxu0 %v1080
        %1089 = vmatprep.subr.mxu0 0.0
        %1090 = vmatpush1.msra.mxu0 0.0
        %1091 = vmatprep.subr.mxu0 0.0
        %1092 = vmatpush1.msra.mxu0 0.0
        %1093 = vmatprep.subr.mxu0 0.0
        %1094 = vmatpush1.msra.mxu0 0.0
        %1095 = vmatprep.subr.mxu0 0.0
        %1096 = vmatpush1.msra.mxu0 0.0
        %1097 = vmatprep.subr.mxu0 0.0
        %1098 = vmatpush1.msra.mxu0 0.0
        %1099 = vmatprep.subr.mxu0 0.0
        %1100 = vmatpush1.msra.mxu0 0.0
        %1101 = vmatprep.subr.mxu0 0.0
        %1102 = vmatpush1.msra.mxu0 0.0
        %1103 = vmatprep.subr.mxu0 0.0
        %1104 = vmatpush1.msra.mxu0 0.0
        %1105 = vmatprep.subr.mxu0 0.0
        %1106 = vmatpush1.msra.mxu0 0.0
        %1107 = vmatprep.subr.mxu0 0.0
        %1108 = vmatpush1.msra.mxu0 0.0
        %1109 = vmatprep.subr.mxu0 0.0
        %1110 = vmatpush1.msra.mxu0 0.0
        %1111 = vmatprep.subr.mxu0 0.0
        %1112 = vmatpush1.msra.mxu0 0.0
        %1113 = vmatprep.subr.mxu0 0.0
        %1114 = vmatpush1.msra.mxu0 0.0
        %1115 = vmatprep.subr.mxu0 0.0
        %1116 = vmatpush1.msra.mxu0 0.0
        %1117 = vmatprep.subr.mxu0 0.0
        %1118 = vmatpush1.msra.mxu0 0.0
        %1119 = vmatprep.subr.mxu0 0.0
        %1120 = vmatpush1.msra.mxu0 0.0
        %1121 = vmatprep.subr.mxu0 0.0
        %1122 = vmatpush1.msra.mxu0 0.0
        %1123 = vmatprep.subr.mxu0 0.0
        %1124 = vmatpush1.msra.mxu0 0.0
        %1125 = vmatprep.subr.mxu0 0.0
        %1126 = vmatpush1.msra.mxu0 0.0
        %1127 = vmatprep.subr.mxu0 0.0
        %1128 = vmatpush1.msra.mxu0 0.0
        %1129 = vmatprep.subr.mxu0 0.0
        %1130 = vmatpush1.msra.mxu0 0.0
        %1131 = vmatprep.subr.mxu0 0.0
        %1132 = vmatpush1.msra.mxu0 0.0
        %1133 = vmatprep.subr.mxu0 0.0
        %1134 = vmatpush1.msra.mxu0 0.0
        %1135 = vmatprep.subr.mxu0 0.0
        %1136 = vmatpush1.msra.mxu0 0.0
        %1137 = vmatprep.subr.mxu0 0.0
        %1138 = vmatpush1.msra.mxu0 0.0
        %1139 = vmatprep.subr.mxu0 0.0
        %1140 = vmatpush1.msra.mxu0 0.0
        %1141 = vmatprep.subr.mxu0 0.0
        %1142 = vmatpush1.msra.mxu0 0.0
        %1143 = vmatprep.subr.mxu0 0.0
        %1144 = vmatpush1.msra.mxu0 0.0
        %1145 = vmatprep.subr.mxu0 0.0
        %1146 = vmatpush1.msra.mxu0 0.0
        %1147 = vmatprep.subr.mxu0 0.0
        %1148 = vmatpush1.msra.mxu0 0.0
        %1149 = vmatprep.mubr.f32.mxu0 0.0
        %1150 = vmatmul.mubr.f32.gmra.mrb[0].mxu0 %v1077
        %v1151 = vpop.f32.mrb[0].mxu0
        %v1152 = vadd.f32 0.0, %v1151
        %v1153 = vpop.f32.mrb[0].mxu0
        %v1154 = vadd.f32 0.0, %v1153
        %1155 = vdwg.mxu0
        %1156 = vst [vmem:[#allocation2] sm:$0x3f] %v1152
        %vm1157 = vcmask 128000
        %1158 = vst.msk [vmem:[#allocation2 + $0x8] sm:$0x3f] %vm1157, %v1154
        %v1161 = vrot.slane %v1152, 1
        %v1162 = vrot.slane %v1154, 1
        %1163 = vrot.lane.b32.xlu0 %v1161, 16
        %v1164 = vpop.permute.xlu0 %1163
        %1165 = vrot.lane.b32.xlu0 %v1162, 16
        %v1166 = vpop.permute.xlu0 %1165
        %v1167 = vsel %vm263, %v1164, %v1166
        %vm1170 = vcmask 1045632
        %1171 = vst.msk [vmem:[#allocation2 + $0x8] sm:$0x3f] %vm1170, %v1164
        %vm1172 = vcmask 259072
        %1173 = vst.msk [vmem:[#allocation2 + $0x10] sm:$0x3f] %vm1172, %v1167
        %v1174 = vrot.slane %v1152, 2
        %v1175 = vrot.slane %v1154, 2
        %1176 = vrot.lane.b32.xlu0 %v1174, 32
        %v1177 = vpop.permute.xlu0 %1176
        %1178 = vrot.lane.b32.xlu0 %v1175, 32
        %v1179 = vpop.permute.xlu0 %1178
        %vm1180 = vcmask 261120
        %v1181 = vsel %vm1180, %v1177, %v1179
        %vm1184 = vcmask 1045760
        %1185 = vst.msk [vmem:[#allocation2 + $0x10] sm:$0x3f] %vm1184, %v1177
        %vm1186 = vcmask 390144
        %1187 = vst.msk [vmem:[#allocation2 + $0x18] sm:$0x3f] %vm1186, %v1181
        %v1188 = vld [vmem:[#allocation5 + $0x390] sm:$0xff]
        %v1189 = vld [vmem:[#allocation5 + $0x398] sm:$0xff]
        %v1190 = vld [vmem:[#allocation5 + $0x3a0] sm:$0xff]
        %v1191 = vld [vmem:[#allocation5 + $0x3a8] sm:$0xff]
        %v1192 = vld [vmem:[#allocation5 + $0x3b0] sm:$0xff]
        %v1193 = vld [vmem:[#allocation5 + $0x3b8] sm:$0xff]
        %v1194 = vld [vmem:[#allocation5 + $0x3c0] sm:$0xff]
        %v1195 = vld [vmem:[#allocation5 + $0x3c8] sm:$0xff]
        %v1196 = vld [vmem:[#allocation5 + $0x3d0] sm:$0xff]
        %v1197 = vld [vmem:[#allocation5 + $0x3d8] sm:$0xff]
        %v1198 = vld [vmem:[#allocation5 + $0x3e0] sm:$0xff]
        %v1199 = vld [vmem:[#allocation5 + $0x3e8] sm:$0xff]
        %v1200 = vld [vmem:[#allocation5 + $0x3f0] sm:$0xff]
        %v1201 = vld [vmem:[#allocation5 + $0x3f8] sm:$0xff]
        %v1202 = vld [vmem:[#allocation5 + $0x400] sm:$0xff]
        %v1203 = vld [vmem:[#allocation5 + $0x408] sm:$0xff]
        %v1204 = vld [vmem:[#allocation5 + $0x410] sm:$0xff]
        %v1205 = vld [vmem:[#allocation5 + $0x418] sm:$0xff]
        %v1206 = vld [vmem:[#allocation5 + $0x420] sm:$0xff]
        %v1207 = vld [vmem:[#allocation5 + $0x428] sm:$0xff]
        %v1208 = vld [vmem:[#allocation5 + $0x430] sm:$0xff]
        %v1209 = vld [vmem:[#allocation5 + $0x438] sm:$0xff]
        %v1210 = vld [vmem:[#allocation5 + $0x440] sm:$0xff]
        %v1211 = vld [vmem:[#allocation5 + $0x448] sm:$0xff]
        %v1212 = vld [vmem:[#allocation5 + $0x450] sm:$0xff]
        %v1213 = vld [vmem:[#allocation5 + $0x458] sm:$0xff]
        %v1214 = vld [vmem:[#allocation5 + $0x460] sm:$0xff]
        %v1215 = vld [vmem:[#allocation5 + $0x468] sm:$0xff]
        %v1216 = vld [vmem:[#allocation5 + $0x470] sm:$0xff]
        %v1217 = vld [vmem:[#allocation5 + $0x478] sm:$0xff]
        %v1218 = vld [vmem:[#allocation5 + $0x480] sm:$0xff]
        %v1219 = vld [vmem:[#allocation5 + $0x488] sm:$0xff]
        %v1220 = vld [vmem:[#allocation5 + $0x490] sm:$0xff]
        %v1221 = vld [vmem:[#allocation5 + $0x498] sm:$0xff]
        %v1222 = vld [vmem:[#allocation5 + $0x4a0] sm:$0xff]
        %v1223 = vld [vmem:[#allocation5 + $0x4a8] sm:$0xff]
        %v1224 = vld [vmem:[#allocation5 + $0x4b0] sm:$0xff]
        %v1225 = vld [vmem:[#allocation5 + $0x4b8] sm:$0xff]
        %v1226 = vld [vmem:[#allocation5 + $0x4c0] sm:$0xff]
        %v1227 = vld [vmem:[#allocation5 + $0x4c8] sm:$0xff]
        %v1228 = vld [vmem:[#allocation5 + $0x4d0] sm:$0xff]
        %v1229 = vld [vmem:[#allocation5 + $0x4d8] sm:$0xff]
        %v1230 = vld [vmem:[#allocation5 + $0x4e0] sm:$0xff]
        %v1231 = vld [vmem:[#allocation5 + $0x4e8] sm:$0xff]
        %v1232 = vld [vmem:[#allocation5 + $0x4f0] sm:$0xff]
        %v1233 = vld [vmem:[#allocation5 + $0x4f8] sm:$0xff]
        %v1234 = vld [vmem:[#allocation5 + $0x500] sm:$0xff]
        %v1235 = vld [vmem:[#allocation5 + $0x508] sm:$0xff]
        %v1236 = vld [vmem:[#allocation5 + $0x510] sm:$0xff]
        %v1237 = vld [vmem:[#allocation5 + $0x518] sm:$0xff]
        %v1238 = vld [vmem:[#allocation5 + $0x520] sm:$0xff]
        %v1239 = vld [vmem:[#allocation5 + $0x528] sm:$0xff]
        %v1240 = vld [vmem:[#allocation5 + $0x530] sm:$0xff]
        %v1241 = vld [vmem:[#allocation5 + $0x538] sm:$0xff]
        %v1242 = vld [vmem:[#allocation5 + $0x540] sm:$0xff]
        %v1243 = vld [vmem:[#allocation5 + $0x548] sm:$0xff]
        %v1244 = vld [vmem:[#allocation5 + $0x550] sm:$0xff]
        %v1245 = vld [vmem:[#allocation5 + $0x558] sm:$0xff]
        %v1246 = vld [vmem:[#allocation5 + $0x560] sm:$0xff]
        %v1247 = vld [vmem:[#allocation5 + $0x568] sm:$0xff]
        %v1248 = vld [vmem:[#allocation5 + $0x570] sm:$0xff]
        %v1249 = vld [vmem:[#allocation5 + $0x578] sm:$0xff]
        %v1250 = vld [vmem:[#allocation5 + $0x580] sm:$0xff]
        %v1251 = vld [vmem:[#allocation5 + $0x588] sm:$0xff]
        %v1252 = vld [vmem:[#allocation5 + $0x590] sm:$0xff]
        %v1253 = vld [vmem:[#allocation5 + $0x598] sm:$0xff]
        %v1254 = vld [vmem:[#allocation5 + $0x5a0] sm:$0xff]
        %v1255 = vld [vmem:[#allocation5 + $0x5a8] sm:$0xff]
        %v1256 = vld [vmem:[#allocation5 + $0x5b0] sm:$0xff]
        %v1257 = vld [vmem:[#allocation5 + $0x5b8] sm:$0xff]
        %v1258 = vld [vmem:[#allocation5 + $0x5c0] sm:$0xff]
        %v1259 = vld [vmem:[#allocation5 + $0x5c8] sm:$0xff]
        %v1260 = vld [vmem:[#allocation5 + $0x5d0] sm:$0xff]
        %v1261 = vld [vmem:[#allocation5 + $0x5d8] sm:$0xff]
        %v1262 = vld [vmem:[#allocation5 + $0x5e0] sm:$0xff]
        %v1263 = vld [vmem:[#allocation5 + $0x5e8] sm:$0xff]
        %v1264 = vld [vmem:[#allocation5 + $0x5f0] sm:$0xff]
        %v1265 = vld [vmem:[#allocation5 + $0x5f8] sm:$0xff]
        %v1266 = vld [vmem:[#allocation5 + $0x600] sm:$0xff]
        %v1267 = vld [vmem:[#allocation5 + $0x608] sm:$0xff]
        %v1268 = vld [vmem:[#allocation5 + $0x610] sm:$0xff]
        %v1269 = vld [vmem:[#allocation5 + $0x618] sm:$0xff]
        %v1270 = vld [vmem:[#allocation5 + $0x620] sm:$0xff]
        %v1271 = vld [vmem:[#allocation5 + $0x628] sm:$0xff]
        %v1272 = vld [vmem:[#allocation5 + $0x630] sm:$0xff]
        %v1273 = vld [vmem:[#allocation5 + $0x638] sm:$0xff]
        %v1274 = vld [vmem:[#allocation5 + $0x640] sm:$0xff]
        %v1275 = vld [vmem:[#allocation5 + $0x648] sm:$0xff]
        %v1276 = vld [vmem:[#allocation5 + $0x650] sm:$0xff]
        %v1277 = vld [vmem:[#allocation5 + $0x658] sm:$0xff]
        %v1278 = vld [vmem:[#allocation5 + $0x660] sm:$0xff]
        %v1279 = vld [vmem:[#allocation5 + $0x668] sm:$0xff]
        %v1280 = vld [vmem:[#allocation5 + $0x670] sm:$0xff]
        %v1281 = vld [vmem:[#allocation5 + $0x678] sm:$0xff]
        %v1282 = vld [vmem:[#allocation5 + $0x680] sm:$0xff]
        %v1283 = vld [vmem:[#allocation5 + $0x688] sm:$0xff]
        %v1284 = vld [vmem:[#allocation5 + $0x690] sm:$0xff]
        %v1285 = vld [vmem:[#allocation5 + $0x698] sm:$0xff]
        %v1286 = vld [vmem:[#allocation5 + $0x6a0] sm:$0xff]
        %v1287 = vld [vmem:[#allocation5 + $0x6a8] sm:$0xff]
        %v1288 = vld [vmem:[#allocation5 + $0x6b0] sm:$0xff]
        %v1289 = vld [vmem:[#allocation5 + $0x6b8] sm:$0xff]
        %v1290 = vld [vmem:[#allocation5 + $0x6c0] sm:$0xff]
        %v1291 = vld [vmem:[#allocation5 + $0x6c8] sm:$0xff]
        %v1292 = vld [vmem:[#allocation5 + $0x6d0] sm:$0xff]
        %v1293 = vld [vmem:[#allocation5 + $0x6d8] sm:$0xff]
        %v1294 = vld [vmem:[#allocation5 + $0x6e0] sm:$0xff]
        %v1295 = vld [vmem:[#allocation5 + $0x6e8] sm:$0xff]
        %s1296 = scalar_lea.vmem [#allocation5], 1778
        %v1297 = vld [vmem:[%s1296] ss:$8 sm:$0x3]
        %v1298 = vld [vmem:[#allocation2] sm:$0x3f]
        %v1299 = vld [vmem:[#allocation2 + $0x8] sm:$0x3f]
        %v1300 = vld [vmem:[#allocation2 + $0x10] sm:$0x3f]
        %v1301 = vld [vmem:[#allocation2 + $0x18] sm:$0x3f]
        %v1303 = vlaneseq
        %v1304 = vshrl.u32 %v1303, 7
        %v1305 = vsub.s32 0, %v1304
        %v1306 = vrot.slane %v1297, %v1305
        %v1307 = vlaneseq
        %v1308 = vshrl.u32 %v1307, 7
        %v1309 = vsub.s32 1, %v1308
        %v1310 = vrot.slane %v1297, %v1309
        %v1314 = vsel %vm428, %v1301, 0
        %1316 = vmatprep.subr.mxu0 %v1189
        %1317 = vmatpush1.msra.mxu0 %v1188
        %1318 = vmatprep.subr.mxu0 %v1191
        %1319 = vmatpush1.msra.mxu0 %v1190
        %1320 = vmatprep.subr.mxu0 %v1193
        %1321 = vmatpush1.msra.mxu0 %v1192
        %1322 = vmatprep.subr.mxu0 %v1195
        %1323 = vmatpush1.msra.mxu0 %v1194
        %1324 = vmatprep.subr.mxu0 %v1197
        %1325 = vmatpush1.msra.mxu0 %v1196
        %1326 = vmatprep.subr.mxu0 %v1199
        %1327 = vmatpush1.msra.mxu0 %v1198
        %1328 = vmatprep.subr.mxu0 %v1201
        %1329 = vmatpush1.msra.mxu0 %v1200
        %1330 = vmatprep.subr.mxu0 %v1203
        %1331 = vmatpush1.msra.mxu0 %v1202
        %1332 = vmatprep.subr.mxu0 %v1205
        %1333 = vmatpush1.msra.mxu0 %v1204
        %1334 = vmatprep.subr.mxu0 %v1207
        %1335 = vmatpush1.msra.mxu0 %v1206
        %1336 = vmatprep.subr.mxu0 %v1209
        %1337 = vmatpush1.msra.mxu0 %v1208
        %1338 = vmatprep.subr.mxu0 %v1211
        %1339 = vmatpush1.msra.mxu0 %v1210
        %1340 = vmatprep.subr.mxu0 %v1213
        %1341 = vmatpush1.msra.mxu0 %v1212
        %1342 = vmatprep.subr.mxu0 %v1215
        %1343 = vmatpush1.msra.mxu0 %v1214
        %1344 = vmatprep.subr.mxu0 %v1217
        %1345 = vmatpush1.msra.mxu0 %v1216
        %1346 = vmatprep.subr.mxu0 %v1219
        %1347 = vmatpush1.msra.mxu0 %v1218
        %1348 = vmatprep.subr.mxu0 %v1221
        %1349 = vmatpush1.msra.mxu0 %v1220
        %1350 = vmatprep.subr.mxu0 %v1223
        %1351 = vmatpush1.msra.mxu0 %v1222
        %1352 = vmatprep.subr.mxu0 %v1225
        %1353 = vmatpush1.msra.mxu0 %v1224
        %1354 = vmatprep.subr.mxu0 %v1227
        %1355 = vmatpush1.msra.mxu0 %v1226
        %1356 = vmatprep.subr.mxu0 %v1229
        %1357 = vmatpush1.msra.mxu0 %v1228
        %1358 = vmatprep.subr.mxu0 %v1231
        %1359 = vmatpush1.msra.mxu0 %v1230
        %1360 = vmatprep.subr.mxu0 %v1233
        %1361 = vmatpush1.msra.mxu0 %v1232
        %1362 = vmatprep.subr.mxu0 %v1235
        %1363 = vmatpush1.msra.mxu0 %v1234
        %1364 = vmatprep.subr.mxu0 %v1237
        %1365 = vmatpush1.msra.mxu0 %v1236
        %1366 = vmatprep.subr.mxu0 %v1239
        %1367 = vmatpush1.msra.mxu0 %v1238
        %1368 = vmatprep.subr.mxu0 %v1241
        %1369 = vmatpush1.msra.mxu0 %v1240
        %1370 = vmatprep.subr.mxu0 %v1243
        %1371 = vmatpush1.msra.mxu0 %v1242
        %1372 = vmatprep.subr.mxu0 %v1245
        %1373 = vmatpush1.msra.mxu0 %v1244
        %1374 = vmatprep.subr.mxu0 %v1247
        %1375 = vmatpush1.msra.mxu0 %v1246
        %1376 = vmatprep.subr.mxu0 %v1249
        %1377 = vmatpush1.msra.mxu0 %v1248
        %1378 = vmatprep.subr.mxu0 %v1251
        %1379 = vmatpush1.msra.mxu0 %v1250
        %1380 = vmatprep.mubr.f32.mxu0 %v1299
        %1381 = vmatmul.mubr.f32.gmra.mrb[0].mxu0 %v1298
        %v1382 = vpop.f32.mrb[0].mxu0
        %v1383 = vadd.f32 %v1306, %v1382
        %v1384 = vpop.f32.mrb[0].mxu0
        %v1385 = vadd.f32 %v1310, %v1384
        %1386 = vdwg.mxu0
        %1387 = vmatprep.subr.mxu0 %v1253
        %1388 = vmatpush1.msra.mxu0 %v1252
        %1389 = vmatprep.subr.mxu0 %v1255
        %1390 = vmatpush1.msra.mxu0 %v1254
        %1391 = vmatprep.subr.mxu0 %v1257
        %1392 = vmatpush1.msra.mxu0 %v1256
        %1393 = vmatprep.subr.mxu0 %v1259
        %1394 = vmatpush1.msra.mxu0 %v1258
        %1395 = vmatprep.subr.mxu0 %v1261
        %1396 = vmatpush1.msra.mxu0 %v1260
        %1397 = vmatprep.subr.mxu0 %v1263
        %1398 = vmatpush1.msra.mxu0 %v1262
        %1399 = vmatprep.subr.mxu0 %v1265
        %1400 = vmatpush1.msra.mxu0 %v1264
        %1401 = vmatprep.subr.mxu0 %v1267
        %1402 = vmatpush1.msra.mxu0 %v1266
        %1403 = vmatprep.subr.mxu0 %v1269
        %1404 = vmatpush1.msra.mxu0 %v1268
        %1405 = vmatprep.subr.mxu0 %v1271
        %1406 = vmatpush1.msra.mxu0 %v1270
        %1407 = vmatprep.subr.mxu0 %v1273
        %1408 = vmatpush1.msra.mxu0 %v1272
        %1409 = vmatprep.subr.mxu0 %v1275
        %1410 = vmatpush1.msra.mxu0 %v1274
        %1411 = vmatprep.subr.mxu0 %v1277
        %1412 = vmatpush1.msra.mxu0 %v1276
        %1413 = vmatprep.subr.mxu0 %v1279
        %1414 = vmatpush1.msra.mxu0 %v1278
        %1415 = vmatprep.subr.mxu0 %v1281
        %1416 = vmatpush1.msra.mxu0 %v1280
        %1417 = vmatprep.subr.mxu0 %v1283
        %1418 = vmatpush1.msra.mxu0 %v1282
        %1419 = vmatprep.subr.mxu0 %v1285
        %1420 = vmatpush1.msra.mxu0 %v1284
        %1421 = vmatprep.subr.mxu0 %v1287
        %1422 = vmatpush1.msra.mxu0 %v1286
        %1423 = vmatprep.subr.mxu0 %v1289
        %1424 = vmatpush1.msra.mxu0 %v1288
        %1425 = vmatprep.subr.mxu0 %v1291
        %1426 = vmatpush1.msra.mxu0 %v1290
        %1427 = vmatprep.subr.mxu0 %v1293
        %1428 = vmatpush1.msra.mxu0 %v1292
        %1429 = vmatprep.subr.mxu0 %v1295
        %1430 = vmatpush1.msra.mxu0 %v1294
        %1431 = vmatprep.subr.mxu0 0.0
        %1432 = vmatpush1.msra.mxu0 0.0
        %1433 = vmatprep.subr.mxu0 0.0
        %1434 = vmatpush1.msra.mxu0 0.0
        %1435 = vmatprep.subr.mxu0 0.0
        %1436 = vmatpush1.msra.mxu0 0.0
        %1437 = vmatprep.subr.mxu0 0.0
        %1438 = vmatpush1.msra.mxu0 0.0
        %1439 = vmatprep.subr.mxu0 0.0
        %1440 = vmatpush1.msra.mxu0 0.0
        %1441 = vmatprep.subr.mxu0 0.0
        %1442 = vmatpush1.msra.mxu0 0.0
        %1443 = vmatprep.subr.mxu0 0.0
        %1444 = vmatpush1.msra.mxu0 0.0
        %1445 = vmatprep.subr.mxu0 0.0
        %1446 = vmatpush1.msra.mxu0 0.0
        %1447 = vmatprep.subr.mxu0 0.0
        %1448 = vmatpush1.msra.mxu0 0.0
        %1449 = vmatprep.subr.mxu0 0.0
        %1450 = vmatpush1.msra.mxu0 0.0
        %1451 = vmatprep.mubr.f32.mxu0 %v1314
        %1452 = vmatmul.mubr.f32.gmra.mrb[0].mxu0 %v1300
        %v1453 = vpop.f32.mrb[0].mxu0
        %v1454 = vadd.f32 %v1383, %v1453
        %v1455 = vpop.f32.mrb[0].mxu0
        %v1456 = vadd.f32 %v1385, %v1455
        %1457 = vdwg.mxu0
        %v1458 = vmax.f32 %v1454, 0.0
        %v1459 = vmax.f32 %v1456, 0.0
        %1462 = vrot.lane.b32.xlu0 %v1458, 96
        %v1463 = vpop.permute.xlu0 %1462
        %1464 = vrot.lane.b32.xlu0 %v1459, 96
        %v1465 = vpop.permute.xlu0 %1464
        %vm1466 = vcmask 785408
        %v1467 = vsel %vm1466, %v1463, %v1465
        %v1470 = vmax.f32 %v1458, %v1467
        %v1471 = vmax.f32 %v1459, %v1465
        %v1474 = vrot.slane %v1470, 1
        %v1475 = vrot.slane %v1471, 1
        %v1478 = vmax.f32 %v1470, %v1474
        %v1479 = vmax.f32 %v1471, %v1475
        %v1480 = vld [vmem:[#allocation8] sm:$0xff]
        %v1481 = vld [vmem:[#allocation8 + $0x8] sm:$0xff]
        %v1482 = vld [vmem:[#allocation8 + $0x10] sm:$0xff]
        %v1483 = vld [vmem:[#allocation8 + $0x18] sm:$0xff]
        %v1484 = vld [vmem:[#allocation8 + $0x20] sm:$0xff]
        %v1485 = vld [vmem:[#allocation8 + $0x28] sm:$0xff]
        %v1486 = vld [vmem:[#allocation8 + $0x30] sm:$0xff]
        %v1487 = vld [vmem:[#allocation8 + $0x38] sm:$0xff]
        %v1488 = vld [vmem:[#allocation8 + $0x40] sm:$0xff]
        %v1489 = vld [vmem:[#allocation8 + $0x48] sm:$0xff]
        %v1490 = vld [vmem:[#allocation8 + $0x50] sm:$0xff]
        %v1491 = vld [vmem:[#allocation8 + $0x58] sm:$0xff]
        %v1492 = vld [vmem:[#allocation8 + $0x60] sm:$0xff]
        %v1493 = vld [vmem:[#allocation8 + $0x68] sm:$0xff]
        %v1494 = vld [vmem:[#allocation8 + $0x70] sm:$0xff]
        %v1495 = vld [vmem:[#allocation8 + $0x78] sm:$0xff]
        %v1496 = vld [vmem:[#allocation8 + $0x80] sm:$0xff]
        %v1497 = vld [vmem:[#allocation8 + $0x88] sm:$0xff]
        %v1498 = vld [vmem:[#allocation8 + $0x90] sm:$0xff]
        %v1499 = vld [vmem:[#allocation8 + $0x98] sm:$0xff]
        %v1501 = vsel %vm1180, %v1479, 0
        %1503 = vmatprep.subr.mxu0 0.0
        %1504 = vmatpush1.msra.mxu0 %v1480
        %1505 = vmatprep.subr.mxu0 0.0
        %1506 = vmatpush1.msra.mxu0 %v1481
        %1507 = vmatprep.subr.mxu0 0.0
        %1508 = vmatpush1.msra.mxu0 %v1482
        %1509 = vmatprep.subr.mxu0 0.0
        %1510 = vmatpush1.msra.mxu0 %v1483
        %1511 = vmatprep.subr.mxu0 0.0
        %1512 = vmatpush1.msra.mxu0 %v1484
        %1513 = vmatprep.subr.mxu0 0.0
        %1514 = vmatpush1.msra.mxu0 %v1485
        %1515 = vmatprep.subr.mxu0 0.0
        %1516 = vmatpush1.msra.mxu0 %v1486
        %1517 = vmatprep.subr.mxu0 0.0
        %1518 = vmatpush1.msra.mxu0 %v1487
        %1519 = vmatprep.subr.mxu0 0.0
        %1520 = vmatpush1.msra.mxu0 %v1488
        %1521 = vmatprep.subr.mxu0 0.0
        %1522 = vmatpush1.msra.mxu0 %v1489
        %1523 = vmatprep.subr.mxu0 0.0
        %1524 = vmatpush1.msra.mxu0 %v1490
        %1525 = vmatprep.subr.mxu0 0.0
        %1526 = vmatpush1.msra.mxu0 %v1491
        %1527 = vmatprep.subr.mxu0 0.0
        %1528 = vmatpush1.msra.mxu0 %v1492
        %1529 = vmatprep.subr.mxu0 0.0
        %1530 = vmatpush1.msra.mxu0 %v1493
        %1531 = vmatprep.subr.mxu0 0.0
        %1532 = vmatpush1.msra.mxu0 %v1494
        %1533 = vmatprep.subr.mxu0 0.0
        %1534 = vmatpush1.msra.mxu0 %v1495
        %1535 = vmatprep.subr.mxu0 0.0
        %1536 = vmatpush1.msra.mxu0 %v1496
        %1537 = vmatprep.subr.mxu0 0.0
        %1538 = vmatpush1.msra.mxu0 %v1497
        %1539 = vmatprep.subr.mxu0 0.0
        %1540 = vmatpush1.msra.mxu0 %v1498
        %1541 = vmatprep.subr.mxu0 0.0
        %1542 = vmatpush1.msra.mxu0 %v1499
        %1543 = vmatprep.subr.mxu0 0.0
        %1544 = vmatpush1.msra.mxu0 0.0
        %1545 = vmatprep.subr.mxu0 0.0
        %1546 = vmatpush1.msra.mxu0 0.0
        %1547 = vmatprep.subr.mxu0 0.0
        %1548 = vmatpush1.msra.mxu0 0.0
        %1549 = vmatprep.subr.mxu0 0.0
        %1550 = vmatpush1.msra.mxu0 0.0
        %1551 = vmatprep.subr.mxu0 0.0
        %1552 = vmatpush1.msra.mxu0 0.0
        %1553 = vmatprep.subr.mxu0 0.0
        %1554 = vmatpush1.msra.mxu0 0.0
        %1555 = vmatprep.subr.mxu0 0.0
        %1556 = vmatpush1.msra.mxu0 0.0
        %1557 = vmatprep.subr.mxu0 0.0
        %1558 = vmatpush1.msra.mxu0 0.0
        %1559 = vmatprep.subr.mxu0 0.0
        %1560 = vmatpush1.msra.mxu0 0.0
        %1561 = vmatprep.subr.mxu0 0.0
        %1562 = vmatpush1.msra.mxu0 0.0
        %1563 = vmatprep.subr.mxu0 0.0
        %1564 = vmatpush1.msra.mxu0 0.0
        %1565 = vmatprep.subr.mxu0 0.0
        %1566 = vmatpush1.msra.mxu0 0.0
        %1567 = vmatprep.mubr.f32.mxu0 %v1501
        %1568 = vmatmul.mubr.f32.gmra.mrb[0].mxu0 %v1478
        %v1569 = vpop.f32.mrb[0].mxu0
        %v1570 = vadd.f32 0.0, %v1569
        %v1571 = vpop.f32.mrb[0].mxu0
        %1572 = vdwg.mxu0
        %v1573 = vld [vmem:[#allocation7 + $0x30] sm:$0x3]
        %vm1574 = vcmask 39936
        %v1576 = vsel %vm1574, %v1573, 0
        %vm1578 = vcmask 1044480
        %v1580 = vsel %vm1578, %v1570, 0
        %1582 = vmatprep.subr.mxu0 0.0
        %1583 = vmatpush1.msra.mxu0 %v1580
        %1584 = vmatprep.subr.mxu0 0.0
        %1585 = vmatpush1.msra.mxu0 0.0
        %1586 = vmatprep.subr.mxu0 0.0
        %1587 = vmatpush1.msra.mxu0 0.0
        %1588 = vmatprep.subr.mxu0 0.0
        %1589 = vmatpush1.msra.mxu0 0.0
        %1590 = vmatprep.subr.mxu0 0.0
        %1591 = vmatpush1.msra.mxu0 0.0
        %1592 = vmatprep.subr.mxu0 0.0
        %1593 = vmatpush1.msra.mxu0 0.0
        %1594 = vmatprep.subr.mxu0 0.0
        %1595 = vmatpush1.msra.mxu0 0.0
        %1596 = vmatprep.subr.mxu0 0.0
        %1597 = vmatpush1.msra.mxu0 0.0
        %1598 = vmatprep.subr.mxu0 0.0
        %1599 = vmatpush1.msra.mxu0 0.0
        %1600 = vmatprep.subr.mxu0 0.0
        %1601 = vmatpush1.msra.mxu0 0.0
        %1602 = vmatprep.subr.mxu0 0.0
        %1603 = vmatpush1.msra.mxu0 0.0
        %1604 = vmatprep.subr.mxu0 0.0
        %1605 = vmatpush1.msra.mxu0 0.0
        %1606 = vmatprep.subr.mxu0 0.0
        %1607 = vmatpush1.msra.mxu0 0.0
        %1608 = vmatprep.subr.mxu0 0.0
        %1609 = vmatpush1.msra.mxu0 0.0
        %1610 = vmatprep.subr.mxu0 0.0
        %1611 = vmatpush1.msra.mxu0 0.0
        %1612 = vmatprep.subr.mxu0 0.0
        %1613 = vmatpush1.msra.mxu0 0.0
        %1614 = vmatprep.subr.mxu0 0.0
        %1615 = vmatpush1.msra.mxu0 0.0
        %1616 = vmatprep.subr.mxu0 0.0
        %1617 = vmatpush1.msra.mxu0 0.0
        %1618 = vmatprep.subr.mxu0 0.0
        %1619 = vmatpush1.msra.mxu0 0.0
        %1620 = vmatprep.subr.mxu0 0.0
        %1621 = vmatpush1.msra.mxu0 0.0
        %1622 = vmatprep.subr.mxu0 0.0
        %1623 = vmatpush1.msra.mxu0 0.0
        %1624 = vmatprep.subr.mxu0 0.0
        %1625 = vmatpush1.msra.mxu0 0.0
        %1626 = vmatprep.subr.mxu0 0.0
        %1627 = vmatpush1.msra.mxu0 0.0
        %1628 = vmatprep.subr.mxu0 0.0
        %1629 = vmatpush1.msra.mxu0 0.0
        %1630 = vmatprep.subr.mxu0 0.0
        %1631 = vmatpush1.msra.mxu0 0.0
        %1632 = vmatprep.subr.mxu0 0.0
        %1633 = vmatpush1.msra.mxu0 0.0
        %1634 = vmatprep.subr.mxu0 0.0
        %1635 = vmatpush1.msra.mxu0 0.0
        %1636 = vmatprep.subr.mxu0 0.0
        %1637 = vmatpush1.msra.mxu0 0.0
        %1638 = vmatprep.subr.mxu0 0.0
        %1639 = vmatpush1.msra.mxu0 0.0
        %1640 = vmatprep.subr.mxu0 0.0
        %1641 = vmatpush1.msra.mxu0 0.0
        %1642 = vmatprep.subr.mxu0 0.0
        %1643 = vmatpush1.msra.mxu0 0.0
        %1644 = vmatprep.subr.mxu0 0.0
        %1645 = vmatpush1.msra.mxu0 0.0
        %1646 = vmatprep.mubr.f32.mxu0 0.0
        %1647 = vmatmul.mubr.f32.gmra.mrb[0].mxu0 %v1576
        %v1648 = vpop.f32.mrb[0].mxu0
        %v1649 = vadd.f32 0.0, %v1648
        %v1650 = vpop.f32.mrb[0].mxu0
        %1651 = vdwg.mxu0
        %v1653 = vrot.slane %v1649, 1
        %1654 = vrot.lane.b32.xlu0 %v1653, 64
        %v1655 = vpop.permute.xlu0 %1654
        %v1657 = vadd.f32 %v1649, %v1655
        %v1658 = vld [vmem:[#allocation8 + $0xa0] sm:$0x1]
        %v1659 = vadd.f32 %v1657, %v1658
        %v1660 = vmax.f32 %v1659, 0.0
        %v1661 = vld [vmem:[#allocation8 + $0xa8] sm:$0xff]
        %v1662 = vld [vmem:[#allocation8 + $0xb0] sm:$0xff]
        %v1663 = vld [vmem:[#allocation8 + $0xb8] sm:$0xff]
        %v1664 = vld [vmem:[#allocation8 + $0xc0] sm:$0xff]
        %v1665 = vld [vmem:[#allocation8 + $0xc8] sm:$0xff]
        %v1666 = vld [vmem:[#allocation8 + $0xd0] sm:$0xff]
        %v1667 = vld [vmem:[#allocation8 + $0xd8] sm:$0xff]
        %v1668 = vld [vmem:[#allocation8 + $0xe0] sm:$0xff]
        %v1669 = vld [vmem:[#allocation8 + $0xa1] sm:$0x1]
        %vm1670 = vcmask 523264
        %v1672 = vsel %vm1670, %v1660, 0
        %1674 = vmatprep.subr.mxu0 0.0
        %1675 = vmatpush1.msra.mxu0 %v1661
        %1676 = vmatprep.subr.mxu0 0.0
        %1677 = vmatpush1.msra.mxu0 %v1662
        %1678 = vmatprep.subr.mxu0 0.0
        %1679 = vmatpush1.msra.mxu0 %v1663
        %1680 = vmatprep.subr.mxu0 0.0
        %1681 = vmatpush1.msra.mxu0 %v1664
        %1682 = vmatprep.subr.mxu0 0.0
        %1683 = vmatpush1.msra.mxu0 %v1665
        %1684 = vmatprep.subr.mxu0 0.0
        %1685 = vmatpush1.msra.mxu0 %v1666
        %1686 = vmatprep.subr.mxu0 0.0
        %1687 = vmatpush1.msra.mxu0 %v1667
        %1688 = vmatprep.subr.mxu0 0.0
        %1689 = vmatpush1.msra.mxu0 %v1668
        %1690 = vmatprep.subr.mxu0 0.0
        %1691 = vmatpush1.msra.mxu0 0.0
        %1692 = vmatprep.subr.mxu0 0.0
        %1693 = vmatpush1.msra.mxu0 0.0
        %1694 = vmatprep.subr.mxu0 0.0
        %1695 = vmatpush1.msra.mxu0 0.0
        %1696 = vmatprep.subr.mxu0 0.0
        %1697 = vmatpush1.msra.mxu0 0.0
        %1698 = vmatprep.subr.mxu0 0.0
        %1699 = vmatpush1.msra.mxu0 0.0
        %1700 = vmatprep.subr.mxu0 0.0
        %1701 = vmatpush1.msra.mxu0 0.0
        %1702 = vmatprep.subr.mxu0 0.0
        %1703 = vmatpush1.msra.mxu0 0.0
        %1704 = vmatprep.subr.mxu0 0.0
        %1705 = vmatpush1.msra.mxu0 0.0
        %1706 = vmatprep.subr.mxu0 0.0
        %1707 = vmatpush1.msra.mxu0 0.0
        %1708 = vmatprep.subr.mxu0 0.0
        %1709 = vmatpush1.msra.mxu0 0.0
        %1710 = vmatprep.subr.mxu0 0.0
        %1711 = vmatpush1.msra.mxu0 0.0
        %1712 = vmatprep.subr.mxu0 0.0
        %1713 = vmatpush1.msra.mxu0 0.0
        %1714 = vmatprep.subr.mxu0 0.0
        %1715 = vmatpush1.msra.mxu0 0.0
        %1716 = vmatprep.subr.mxu0 0.0
        %1717 = vmatpush1.msra.mxu0 0.0
        %1718 = vmatprep.subr.mxu0 0.0
        %1719 = vmatpush1.msra.mxu0 0.0
        %1720 = vmatprep.subr.mxu0 0.0
        %1721 = vmatpush1.msra.mxu0 0.0
        %1722 = vmatprep.subr.mxu0 0.0
        %1723 = vmatpush1.msra.mxu0 0.0
        %1724 = vmatprep.subr.mxu0 0.0
        %1725 = vmatpush1.msra.mxu0 0.0
        %1726 = vmatprep.subr.mxu0 0.0
        %1727 = vmatpush1.msra.mxu0 0.0
        %1728 = vmatprep.subr.mxu0 0.0
        %1729 = vmatpush1.msra.mxu0 0.0
        %1730 = vmatprep.subr.mxu0 0.0
        %1731 = vmatpush1.msra.mxu0 0.0
        %1732 = vmatprep.subr.mxu0 0.0
        %1733 = vmatpush1.msra.mxu0 0.0
        %1734 = vmatprep.subr.mxu0 0.0
        %1735 = vmatpush1.msra.mxu0 0.0
        %1736 = vmatprep.subr.mxu0 0.0
        %1737 = vmatpush1.msra.mxu0 0.0
        %1738 = vmatprep.mubr.f32.mxu0 0.0
        %1739 = vmatmul.mubr.f32.gmra.mrb[0].mxu0 %v1672
        %v1740 = vpop.f32.mrb[0].mxu0
        %v1741 = vadd.f32 %v1669, %v1740
        %v1742 = vpop.f32.mrb[0].mxu0
        %1743 = vdwg.mxu0
        %v1744 = vmax.f32 %v1741, -15.0
        %v1745 = vmin.f32 %v1744, 15.0
        %v1746 = vsub.f32 0.0, %v1745
        %v1747 = vmul.f32 %v1746, 1.442695
        %v1748 = vpow.pop %v1747
        %v1749 = vadd.f32 %v1748, 1.0
        %v1750 = vrcp.pop %v1749
        %v1751 = vmul.f32 1.0, %v1750
        %vm1752 = vcmask 0
        %1753 = vst.msk [vmem:[%s257] sm:$0x1] %vm1752, %v1751
        %p1754 = scmp.lt.s32.totalorder %s20, 1
        %s1755 = scalar_select %p1754, %s20, 1
        %s1756 = scalar_lea.vmem %s4, %s1755
        // Predicated region
        $region53: #{forward.1} parent=35 // pred_check
          %p1757 = pneg %p127
        $region54: #{forward.1} parent=35 // pred_check_branch
          %1759 = sbr.rel (%p1757) target = $region56
        $region55: #{forward.1} parent=35 // pred_region
          _
        $region56: #{forward.1} parent=35 // pred_fallthru
          _
      $region36: #{forward.1} parent=5 // pred_fallthru
        _
      %p1760 = scmp.le.s32.totalorder 2, %s15
      // Predicated region
      $region57: #{forward.1} parent=5 // pred_check
        %p1761 = pneg %p1760
      $region58: #{forward.1} parent=5 // pred_check_branch
        %1763 = sbr.rel (%p1761) target = $region60
      $region59: #{forward.1} parent=5 // pred_region
        %s1764 = ssub.s32 %s15, 2
        // Predicated region
        $region61: #{forward.1} parent=59 // pred_check
          %p1765 = pneg %p133
        $region62: #{forward.1} parent=59 // pred_check_branch
          %1767 = sbr.rel (%p1765) target = $region64
        $region63: #{forward.1} parent=59 // pred_region
          %p1768 = scmp.lt.s32.totalorder %s21, 1
          %s1769 = scalar_select %p1768, %s21, 1
          %s1770 = scalar_lea.vmem %s4, %s1769
        $region64: #{forward.1} parent=59 // pred_fallthru
          _
      $region60: #{forward.1} parent=5 // pred_fallthru
        _
    $region6: #{forward.1} parent=1 // loop_footer
      %s19 = sadd.s32 1, %s15
    $region7: #{forward.1} parent=1 // loop_footer_branch
      %14 = sbr.rel target = $region3
    $region8: #{forward.1} parent=1 // loop_exit
      _
    %1771 = vsyncpa [#allocation4], 1
    %s1772 = scalar_lea.sflag [#allocation4], 1
    %1773 = vsyncpa %s1772, 1
    %1774 = vsyncpa [#allocation6], 1
    %1775 = vsyncpa [#allocation9], 1

</llo_original>
